<compile_context>
chip_gen: v6e
topology: v6e:2x2x1
jax: 0.10.0
libtpu: 0.0.40
codegen_flags: <defaults>
</compile_context>

<pallas_src>
import functools

import jax
import jax.numpy as jnp
from jax import lax
from jax.experimental import pallas as pl
from jax.experimental.pallas import tpu as pltpu

_LANE = 128
_SUBLANE = 8
_BIG = 1e30  # sigmoid(_BIG) == 1.0 exactly in f32 -> padded timesteps are no-ops


def _round_up(x, m):
    return ((x + m - 1) // m) * m


def _gru_recurrent_kernel(gi_ref, wh_ref, bhn_ref, out_ref, h_ref,
                          *, hidden_pad, unroll):
    """Grid step = (batch block b, time chunk c) of the GRU recurrence.

    gi_ref : (TC, TB, 3*Hp)  precomputed input projections (+ fused r/z biases),
                             gate order [r, z, n]; padded tail timesteps have
                             their z-gate lanes preloaded with +1e30 so z == 1
                             and the step is a no-op (no mask/select needed).
    wh_ref : (Hp, 3*Hp)      fused hidden->gate weights (param_dtype, e.g. bf16)
    bhn_ref: (1, Hp)         hidden bias of the n-gate (must stay inside r*(...))
    out_ref: (TB, Hp)        running max over time (resident across time chunks)
    h_ref  : (TB, Hp)        hidden-state scratch (resident across time chunks)
    """
    c = pl.program_id(1)          # time-chunk index (sequential recurrence axis)
    tc = gi_ref.shape[0]
    tb = h_ref.shape[0]
    hp = hidden_pad

    @pl.when(c == 0)
    def _():
        h_ref[...] = jnp.zeros_like(h_ref)
        out_ref[...] = jnp.full_like(out_ref, -jnp.inf)

    wh = wh_ref[...]                                  # loop-invariant weights
    # Hoisted: broadcast b_hn ONCE per chunk, not once per unrolled timestep.
    bhn_b = jnp.broadcast_to(bhn_ref[...], (tb, hp)).astype(jnp.float32)

    def step(t, carry):
        h, m = carry                                             # f32 (TB, Hp)
        gi = gi_ref[t]                                           # (TB, 3Hp)
        gh = jnp.dot(h.astype(wh.dtype), wh,
                     preferred_element_type=jnp.float32)         # (TB, 3Hp) f32
        r = jax.nn.sigmoid(gi[:, :hp] + gh[:, :hp])
        z = jax.nn.sigmoid(gi[:, hp:2 * hp] + gh[:, hp:2 * hp])
        n = jnp.tanh(gi[:, 2 * hp:] + r * (gh[:, 2 * hp:] + bhn_b))
        h_new = n + z * (h - n)        # == (1-z)*n + z*h, one VPU op fewer
        m_new = jnp.maximum(m, h_new)
        return h_new, m_new

    h_fin, m_fin = lax.fori_loop(0, tc, step, (h_ref[...], out_ref[...]),
                                 unroll=unroll)
    h_ref[...] = h_fin
    out_ref[...] = m_fin


def my_gru_forward(x, w_ih, w_hh, b_ih, b_hh, hidden_size, *,
                   time_chunk=16, batch_block=8, param_dtype=jnp.bfloat16):
    """MyGRU.forward: squeeze -> GRU over time -> AdaptiveMaxPool1d(1).

    x    : (B, C, T, 1, 1) float32       (PyTorch NCHW-like input)
    w_ih : (3H, C), w_hh : (3H, H), b_ih : (3H,), b_hh : (3H,)  -- nn.GRU params
    returns f : (B, H) float32
    """
    assert batch_block % _SUBLANE == 0
    B, C, T = int(x.shape[0]), int(x.shape[1]), int(x.shape[2])
    H = hidden_size
    Hp = _round_up(H, _LANE)             # lane-dense hidden width
    TB = batch_block
    Bp = _round_up(max(B, 1), TB)        # sublane-dense, batch-block divisible
    f32 = jnp.float32

    # --- glue (plain JAX): drop trailing singletons, go time-major (T, B, C) ---
    x_tbc = jnp.transpose(x.reshape(B, C, T), (2, 0, 1)).astype(f32)

    # --- fuse + pad parameters (gate order [r, z, n]) ---
    wi3 = w_ih.astype(f32).reshape(3, H, C)
    wh3 = w_hh.astype(f32).reshape(3, H, H)
    bi3 = b_ih.astype(f32).reshape(3, H)
    bh3 = b_hh.astype(f32).reshape(3, H)

    pad_h = Hp - H
    wi3 = jnp.pad(wi3, ((0, 0), (0, pad_h), (0, 0)))              # (3, Hp, C)
    wh3 = jnp.pad(wh3, ((0, 0), (0, pad_h), (0, pad_h)))          # (3, Hp, Hp)
    # r/z biases fold together; the n-gate hidden bias stays separate (it is
    # multiplied by r inside the cell).
    b_rzn = jnp.stack([bi3[0] + bh3[0], bi3[1] + bh3[1], bi3[2]], axis=0)
    b_rzn = jnp.pad(b_rzn, ((0, 0), (0, pad_h)))                  # (3, Hp)
    bhn = jnp.pad(bh3[2], ((0, pad_h),)).reshape(1, Hp)           # (1, Hp) f32

    wi_cat = jnp.transpose(wi3, (2, 0, 1)).reshape(C, 3 * Hp)     # (C, 3Hp)
    wh_cat = jnp.transpose(wh3, (2, 0, 1)).reshape(Hp, 3 * Hp)    # (Hp, 3Hp)
    b_cat = b_rzn.reshape(1, 3 * Hp)

    # --- hoisted non-recurrent input projection: ONE GEMM over all timesteps ---
    gi_all = (x_tbc.reshape(T * B, C) @ wi_cat + b_cat).reshape(T, B, 3 * Hp)

    # --- pad batch to a sublane-dense, batch-block-divisible width ---
    if Bp != B:
        gi_all = jnp.pad(gi_all, ((0, 0), (0, Bp - B), (0, 0)))

    # --- bf16 stream/weights (halves HBM + VMEM; f32 accumulation in-kernel) ---
    gi_all = gi_all.astype(param_dtype)
    wh_mm = wh_cat.astype(param_dtype)

    # --- chunk time; pad the tail chunk with "no-op" timesteps: z lanes = +BIG
    #     -> sigmoid(z) = 1, h_new == h, running max unchanged; no in-kernel mask.
    TC = max(1, min(time_chunk, T))
    num_chunks = pl.cdiv(T, TC)
    Tp = num_chunks * TC
    if Tp != T:
        tail = jnp.zeros((Tp - T, Bp, 3 * Hp), param_dtype)
        tail = tail.at[:, :, Hp:2 * Hp].set(jnp.asarray(_BIG, param_dtype))
        gi_all = jnp.concatenate([gi_all, tail], axis=0)

    unroll = next(u for u in (8, 4, 2, 1) if TC % u == 0)   # partial unroll
    kernel = functools.partial(_gru_recurrent_kernel,
                               hidden_pad=Hp, unroll=unroll)

    grid_spec = pltpu.PrefetchScalarGridSpec(
        num_scalar_prefetch=0,
        grid=(Bp // TB, num_chunks),        # (parallel batch, sequential time)
        in_specs=[
            pl.BlockSpec((TC, TB, 3 * Hp), lambda b, c: (c, b, 0)),
            # TODO(synk): mark the two invariant operands below with
            # pipeline_mode=pl.Buffered(1) once single-buffered inputs are
            # accepted by the installed pallas TPU lowering (saves one
            # Hp x 3Hp weight buffer of VMEM, mostly relevant on v7x).
            pl.BlockSpec((Hp, 3 * Hp), lambda b, c: (0, 0)),
            pl.BlockSpec((1, Hp), lambda b, c: (0, 0)),
        ],
        out_specs=pl.BlockSpec((TB, Hp), lambda b, c: (b, 0)),
        scratch_shapes=[pltpu.VMEM((TB, Hp), jnp.float32)],
    )

    out = pl.pallas_call(
        kernel,
        out_shape=jax.ShapeDtypeStruct((Bp, Hp), jnp.float32),
        grid_spec=grid_spec,
        compiler_params=pltpu.CompilerParams(
            # batch blocks are independent sequences (usable by v7x's 2 TCs);
            # the time axis is a true recurrence.
            dimension_semantics=("parallel", "arbitrary")),
    )(gi_all, wh_mm, bhn)

    # TODO(synk): for large B/Hp/TC on v7x (64 MiB VMEM) shrink time_chunk or
    # raise vmem_limit_bytes; at these sizes the default scoped VMEM is ample.
    return out[:B, :H]


def _reference_forward(x, w_ih, w_hh, b_ih, b_hh, hidden_size):
    """Pure-JAX reference of MyGRU.forward (for correctness check)."""
    B, C, T = x.shape[0], x.shape[1], x.shape[2]
    H = hidden_size
    xt = jnp.transpose(x.reshape(B, C, T), (2, 0, 1)).astype(jnp.float32)  # (T,B,C)
    wi = jnp.transpose(w_ih.reshape(3, H, C), (0, 2, 1))
    wh = jnp.transpose(w_hh.reshape(3, H, H), (0, 2, 1))
    bi = b_ih.reshape(3, 1, H)
    bh = b_hh.reshape(3, 1, H)

    def step(h, x_t):
        gi = [x_t @ wi[g] + bi[g] for g in range(3)]
        gh = [h @ wh[g] + bh[g] for g in range(3)]
        r = jax.nn.sigmoid(gi[0] + gh[0])
        z = jax.nn.sigmoid(gi[1] + gh[1])
        n = jnp.tanh(gi[2] + r * gh[2])
        h_new = (1.0 - z) * n + z * h
        return h_new, h_new

    h0 = jnp.zeros((B, H), jnp.float32)
    _, hs = lax.scan(step, h0, xt)          # (T, B, H)
    return jnp.max(hs, axis=0)              # (B, H) == AdaptiveMaxPool1d(1)


if __name__ == "__main__":
    B, C, T, H = 2, 4, 8, 32   # batch, input_size (channels), seq length, hidden

    key = jax.random.PRNGKey(0)
    kx, k1, k2, k3, k4 = jax.random.split(key, 5)

    # Deterministic synthetic params, matching nn.GRU's uniform(-1/sqrt(H), 1/sqrt(H)).
    bound = 1.0 / float(H) ** 0.5
    w_ih = jax.random.uniform(k1, (3 * H, C), jnp.float32, -bound, bound)
    w_hh = jax.random.uniform(k2, (3 * H, H), jnp.float32, -bound, bound)
    b_ih = jax.random.uniform(k3, (3 * H,), jnp.float32, -bound, bound)
    b_hh = jax.random.uniform(k4, (3 * H,), jnp.float32, -bound, bound)
    x = jax.random.normal(kx, (B, C, T, 1, 1), jnp.float32)

    ref = _reference_forward(x, w_ih, w_hh, b_ih, b_hh, H)

    # 1) f32 weights/stream, single time chunk: tight check vs the reference.
    fwd_f32 = jax.jit(functools.partial(my_gru_forward, hidden_size=H,
                                        param_dtype=jnp.float32))
    out_f32 = jax.block_until_ready(fwd_f32(x, w_ih, w_hh, b_ih, b_hh))
    assert out_f32.shape == (B, H)
    assert jnp.allclose(out_f32, ref, atol=1e-4, rtol=1e-4), "f32 mismatch"

    # 2) f32, multiple chunks + padded-tail timesteps (exercises the z=+BIG
    #    no-op padding path and the 2-D grid with a multi-step time axis).
    fwd_chunked = jax.jit(functools.partial(my_gru_forward, hidden_size=H,
                                            param_dtype=jnp.float32,
                                            time_chunk=3))
    out_chk = jax.block_until_ready(fwd_chunked(x, w_ih, w_hh, b_ih, b_hh))
    assert jnp.allclose(out_chk, ref, atol=1e-4, rtol=1e-4), "chunked mismatch"

    # 3) Default production path: bf16 weights + bf16 gi stream, f32 accumulation.
    fwd = jax.jit(functools.partial(my_gru_forward, hidden_size=H))
    out = jax.block_until_ready(fwd(x, w_ih, w_hh, b_ih, b_hh))
    assert out.shape == (B, H)
    assert jnp.allclose(out, ref, atol=3e-2, rtol=3e-2), "bf16 mismatch"

    print("KERNEL_OK")
</pallas_src>

<mosaic_0001>
module attributes {stable_mosaic.version = 11 : i64} {
  func.func @_gru_recurrent_kernel(%arg0: i32, %arg1: i32, %arg2: memref<8x8x384xf32, #tpu.memory_space<vmem>>, %arg3: memref<128x384xf32, #tpu.memory_space<vmem>>, %arg4: memref<1x128xf32, #tpu.memory_space<vmem>>, %arg5: memref<8x128xf32, #tpu.memory_space<vmem>>, %arg6: memref<8x128xf32, #tpu.memory_space<vmem>>) attributes {dimension_semantics = [#tpu.dimension_semantics<parallel>, #tpu.dimension_semantics<arbitrary>], iteration_bounds = array<i64: 1, 1>, scalar_prefetch = 0 : i64, scratch_operands = 1 : i64, tpu.core_type = #tpu.core_type<tc>, window_params = [{transform_indices = @transform_0, window_bounds = array<i64: 8, 8, 384>}, {pipeline_mode = #tpu.pipeline_mode<synchronous>, transform_indices = @transform_1, window_bounds = array<i64: 128, 384>}, {pipeline_mode = #tpu.pipeline_mode<synchronous>, transform_indices = @transform_2, window_bounds = array<i64: 1, 128>}, {transform_indices = @transform_3, window_bounds = array<i64: 8, 128>}]} {
    %c0_i32 = arith.constant 0 : i32
    %0 = arith.cmpi eq, %arg1, %c0_i32 : i32
    %1 = arith.extui %0 : i1 to i32
    %c0_i32_0 = arith.constant 0 : i32
    %2 = arith.cmpi ne, %1, %c0_i32_0 : i32
    scf.if %2 {
      %cst_52 = arith.constant 0.000000e+00 : f32
      %251 = vector.broadcast %cst_52 : f32 to vector<8x128xf32>
      %c0_53 = arith.constant 0 : index
      %c0_54 = arith.constant 0 : index
      %252 = vector.load %arg6[%c0_53, %c0_54] : memref<8x128xf32, #tpu.memory_space<vmem>>, vector<8x128xf32>
      tpu.vector_store %arg6[%c0_53, %c0_54], %251 {strides = array<i32>} : memref<8x128xf32, #tpu.memory_space<vmem>>, vector<8x128xf32>,
      %cst_55 = arith.constant 0xFF800000 : f32
      %253 = vector.broadcast %cst_55 : f32 to vector<8x128xf32>
      %c0_56 = arith.constant 0 : index
      %c0_57 = arith.constant 0 : index
      %254 = vector.load %arg5[%c0_56, %c0_57] : memref<8x128xf32, #tpu.memory_space<vmem>>, vector<8x128xf32>
      tpu.vector_store %arg5[%c0_56, %c0_57], %253 {strides = array<i32>} : memref<8x128xf32, #tpu.memory_space<vmem>>, vector<8x128xf32>,
    } else {
    }
    %c0 = arith.constant 0 : index
    %c0_1 = arith.constant 0 : index
    %3 = vector.load %arg3[%c0, %c0_1] : memref<128x384xf32, #tpu.memory_space<vmem>>, vector<128x384xf32>
    %c0_2 = arith.constant 0 : index
    %c0_3 = arith.constant 0 : index
    %4 = vector.load %arg4[%c0_2, %c0_3] : memref<1x128xf32, #tpu.memory_space<vmem>>, vector<1x128xf32>
    %5 = vector.shape_cast %4 : vector<1x128xf32> to vector<1x128xf32>
    %6 = vector.broadcast %5 : vector<1x128xf32> to vector<8x128xf32>
    %c0_4 = arith.constant 0 : index
    %c0_5 = arith.constant 0 : index
    %7 = vector.load %arg6[%c0_4, %c0_5] : memref<8x128xf32, #tpu.memory_space<vmem>>, vector<8x128xf32>
    %c0_6 = arith.constant 0 : index
    %c0_7 = arith.constant 0 : index
    %8 = vector.load %arg5[%c0_6, %c0_7] : memref<8x128xf32, #tpu.memory_space<vmem>>, vector<8x128xf32>
    %c0_i32_8 = arith.constant 0 : i32
    %9 = arith.index_cast %c0_i32_8 : i32 to index
    %c0_9 = arith.constant 0 : index
    %c0_10 = arith.constant 0 : index
    %10 = vector.load %arg2[%9, %c0_9, %c0_10] : memref<8x8x384xf32, #tpu.memory_space<vmem>>, vector<1x8x384xf32>
    %11 = vector.shape_cast %10 : vector<1x8x384xf32> to vector<8x384xf32>
    %cst = arith.constant dense<0.000000e+00> : vector<8x384xf32>
    %12 = tpu.matmul %7, %3, %cst {dimension_numbers = #tpu.dot_dimension_numbers<[1], [0], [0], [1], [0, 0, 1, 1], [], []>} : vector<8x128xf32>, vector<128x384xf32>, vector<8x384xf32> -> vector<8x384xf32>
    %13 = vector.extract_strided_slice %11 {offsets = [0, 0], sizes = [8, 128], strides = [1, 1]} : vector<8x384xf32> to vector<8x128xf32>
    %14 = vector.extract_strided_slice %12 {offsets = [0, 0], sizes = [8, 128], strides = [1, 1]} : vector<8x384xf32> to vector<8x128xf32>
    %15 = arith.addf %13, %14 : vector<8x128xf32>
    %16 = arith.negf %15 : vector<8x128xf32>
    %17 = math.exp %16 : vector<8x128xf32>
    %cst_11 = arith.constant 1.000000e+00 : f32
    %18 = vector.broadcast %cst_11 : f32 to vector<8x128xf32>
    %19 = arith.addf %18, %17 : vector<8x128xf32>
    %20 = arith.divf %18, %19 : vector<8x128xf32>
    %21 = vector.extract_strided_slice %11 {offsets = [0, 128], sizes = [8, 128], strides = [1, 1]} : vector<8x384xf32> to vector<8x128xf32>
    %22 = vector.extract_strided_slice %12 {offsets = [0, 128], sizes = [8, 128], strides = [1, 1]} : vector<8x384xf32> to vector<8x128xf32>
    %23 = arith.addf %21, %22 : vector<8x128xf32>
    %24 = arith.negf %23 : vector<8x128xf32>
    %25 = math.exp %24 : vector<8x128xf32>
    %cst_12 = arith.constant 1.000000e+00 : f32
    %26 = vector.broadcast %cst_12 : f32 to vector<8x128xf32>
    %27 = arith.addf %26, %25 : vector<8x128xf32>
    %28 = arith.divf %26, %27 : vector<8x128xf32>
    %29 = vector.extract_strided_slice %11 {offsets = [0, 256], sizes = [8, 128], strides = [1, 1]} : vector<8x384xf32> to vector<8x128xf32>
    %30 = vector.extract_strided_slice %12 {offsets = [0, 256], sizes = [8, 128], strides = [1, 1]} : vector<8x384xf32> to vector<8x128xf32>
    %31 = arith.addf %30, %6 : vector<8x128xf32>
    %32 = arith.mulf %20, %31 : vector<8x128xf32>
    %33 = arith.addf %29, %32 : vector<8x128xf32>
    %34 = math.tanh %33 : vector<8x128xf32>
    %35 = arith.subf %7, %34 : vector<8x128xf32>
    %36 = arith.mulf %28, %35 : vector<8x128xf32>
    %37 = arith.addf %34, %36 : vector<8x128xf32>
    %38 = arith.maximumf %8, %37 : vector<8x128xf32>
    %c1_i32 = arith.constant 1 : i32
    %39 = arith.index_cast %c1_i32 : i32 to index
    %c0_13 = arith.constant 0 : index
    %c0_14 = arith.constant 0 : index
    %40 = vector.load %arg2[%39, %c0_13, %c0_14] : memref<8x8x384xf32, #tpu.memory_space<vmem>>, vector<1x8x384xf32>
    %41 = vector.shape_cast %40 : vector<1x8x384xf32> to vector<8x384xf32>
    %cst_15 = arith.constant dense<0.000000e+00> : vector<8x384xf32>
    %42 = tpu.matmul %37, %3, %cst_15 {dimension_numbers = #tpu.dot_dimension_numbers<[1], [0], [0], [1], [0, 0, 1, 1], [], []>} : vector<8x128xf32>, vector<128x384xf32>, vector<8x384xf32> -> vector<8x384xf32>
    %43 = vector.extract_strided_slice %41 {offsets = [0, 0], sizes = [8, 128], strides = [1, 1]} : vector<8x384xf32> to vector<8x128xf32>
    %44 = vector.extract_strided_slice %42 {offsets = [0, 0], sizes = [8, 128], strides = [1, 1]} : vector<8x384xf32> to vector<8x128xf32>
    %45 = arith.addf %43, %44 : vector<8x128xf32>
    %46 = arith.negf %45 : vector<8x128xf32>
    %47 = math.exp %46 : vector<8x128xf32>
    %cst_16 = arith.constant 1.000000e+00 : f32
    %48 = vector.broadcast %cst_16 : f32 to vector<8x128xf32>
    %49 = arith.addf %48, %47 : vector<8x128xf32>
    %50 = arith.divf %48, %49 : vector<8x128xf32>
    %51 = vector.extract_strided_slice %41 {offsets = [0, 128], sizes = [8, 128], strides = [1, 1]} : vector<8x384xf32> to vector<8x128xf32>
    %52 = vector.extract_strided_slice %42 {offsets = [0, 128], sizes = [8, 128], strides = [1, 1]} : vector<8x384xf32> to vector<8x128xf32>
    %53 = arith.addf %51, %52 : vector<8x128xf32>
    %54 = arith.negf %53 : vector<8x128xf32>
    %55 = math.exp %54 : vector<8x128xf32>
    %cst_17 = arith.constant 1.000000e+00 : f32
    %56 = vector.broadcast %cst_17 : f32 to vector<8x128xf32>
    %57 = arith.addf %56, %55 : vector<8x128xf32>
    %58 = arith.divf %56, %57 : vector<8x128xf32>
    %59 = vector.extract_strided_slice %41 {offsets = [0, 256], sizes = [8, 128], strides = [1, 1]} : vector<8x384xf32> to vector<8x128xf32>
    %60 = vector.extract_strided_slice %42 {offsets = [0, 256], sizes = [8, 128], strides = [1, 1]} : vector<8x384xf32> to vector<8x128xf32>
    %61 = arith.addf %60, %6 : vector<8x128xf32>
    %62 = arith.mulf %50, %61 : vector<8x128xf32>
    %63 = arith.addf %59, %62 : vector<8x128xf32>
    %64 = math.tanh %63 : vector<8x128xf32>
    %65 = arith.subf %37, %64 : vector<8x128xf32>
    %66 = arith.mulf %58, %65 : vector<8x128xf32>
    %67 = arith.addf %64, %66 : vector<8x128xf32>
    %68 = arith.maximumf %38, %67 : vector<8x128xf32>
    %c2_i32 = arith.constant 2 : i32
    %69 = arith.index_cast %c2_i32 : i32 to index
    %c0_18 = arith.constant 0 : index
    %c0_19 = arith.constant 0 : index
    %70 = vector.load %arg2[%69, %c0_18, %c0_19] : memref<8x8x384xf32, #tpu.memory_space<vmem>>, vector<1x8x384xf32>
    %71 = vector.shape_cast %70 : vector<1x8x384xf32> to vector<8x384xf32>
    %cst_20 = arith.constant dense<0.000000e+00> : vector<8x384xf32>
    %72 = tpu.matmul %67, %3, %cst_20 {dimension_numbers = #tpu.dot_dimension_numbers<[1], [0], [0], [1], [0, 0, 1, 1], [], []>} : vector<8x128xf32>, vector<128x384xf32>, vector<8x384xf32> -> vector<8x384xf32>
    %73 = vector.extract_strided_slice %71 {offsets = [0, 0], sizes = [8, 128], strides = [1, 1]} : vector<8x384xf32> to vector<8x128xf32>
    %74 = vector.extract_strided_slice %72 {offsets = [0, 0], sizes = [8, 128], strides = [1, 1]} : vector<8x384xf32> to vector<8x128xf32>
    %75 = arith.addf %73, %74 : vector<8x128xf32>
    %76 = arith.negf %75 : vector<8x128xf32>
    %77 = math.exp %76 : vector<8x128xf32>
    %cst_21 = arith.constant 1.000000e+00 : f32
    %78 = vector.broadcast %cst_21 : f32 to vector<8x128xf32>
    %79 = arith.addf %78, %77 : vector<8x128xf32>
    %80 = arith.divf %78, %79 : vector<8x128xf32>
    %81 = vector.extract_strided_slice %71 {offsets = [0, 128], sizes = [8, 128], strides = [1, 1]} : vector<8x384xf32> to vector<8x128xf32>
    %82 = vector.extract_strided_slice %72 {offsets = [0, 128], sizes = [8, 128], strides = [1, 1]} : vector<8x384xf32> to vector<8x128xf32>
    %83 = arith.addf %81, %82 : vector<8x128xf32>
    %84 = arith.negf %83 : vector<8x128xf32>
    %85 = math.exp %84 : vector<8x128xf32>
    %cst_22 = arith.constant 1.000000e+00 : f32
    %86 = vector.broadcast %cst_22 : f32 to vector<8x128xf32>
    %87 = arith.addf %86, %85 : vector<8x128xf32>
    %88 = arith.divf %86, %87 : vector<8x128xf32>
    %89 = vector.extract_strided_slice %71 {offsets = [0, 256], sizes = [8, 128], strides = [1, 1]} : vector<8x384xf32> to vector<8x128xf32>
    %90 = vector.extract_strided_slice %72 {offsets = [0, 256], sizes = [8, 128], strides = [1, 1]} : vector<8x384xf32> to vector<8x128xf32>
    %91 = arith.addf %90, %6 : vector<8x128xf32>
    %92 = arith.mulf %80, %91 : vector<8x128xf32>
    %93 = arith.addf %89, %92 : vector<8x128xf32>
    %94 = math.tanh %93 : vector<8x128xf32>
    %95 = arith.subf %67, %94 : vector<8x128xf32>
    %96 = arith.mulf %88, %95 : vector<8x128xf32>
    %97 = arith.addf %94, %96 : vector<8x128xf32>
    %98 = arith.maximumf %68, %97 : vector<8x128xf32>
    %c3_i32 = arith.constant 3 : i32
    %99 = arith.index_cast %c3_i32 : i32 to index
    %c0_23 = arith.constant 0 : index
    %c0_24 = arith.constant 0 : index
    %100 = vector.load %arg2[%99, %c0_23, %c0_24] : memref<8x8x384xf32, #tpu.memory_space<vmem>>, vector<1x8x384xf32>
    %101 = vector.shape_cast %100 : vector<1x8x384xf32> to vector<8x384xf32>
    %cst_25 = arith.constant dense<0.000000e+00> : vector<8x384xf32>
    %102 = tpu.matmul %97, %3, %cst_25 {dimension_numbers = #tpu.dot_dimension_numbers<[1], [0], [0], [1], [0, 0, 1, 1], [], []>} : vector<8x128xf32>, vector<128x384xf32>, vector<8x384xf32> -> vector<8x384xf32>
    %103 = vector.extract_strided_slice %101 {offsets = [0, 0], sizes = [8, 128], strides = [1, 1]} : vector<8x384xf32> to vector<8x128xf32>
    %104 = vector.extract_strided_slice %102 {offsets = [0, 0], sizes = [8, 128], strides = [1, 1]} : vector<8x384xf32> to vector<8x128xf32>
    %105 = arith.addf %103, %104 : vector<8x128xf32>
    %106 = arith.negf %105 : vector<8x128xf32>
    %107 = math.exp %106 : vector<8x128xf32>
    %cst_26 = arith.constant 1.000000e+00 : f32
    %108 = vector.broadcast %cst_26 : f32 to vector<8x128xf32>
    %109 = arith.addf %108, %107 : vector<8x128xf32>
    %110 = arith.divf %108, %109 : vector<8x128xf32>
    %111 = vector.extract_strided_slice %101 {offsets = [0, 128], sizes = [8, 128], strides = [1, 1]} : vector<8x384xf32> to vector<8x128xf32>
    %112 = vector.extract_strided_slice %102 {offsets = [0, 128], sizes = [8, 128], strides = [1, 1]} : vector<8x384xf32> to vector<8x128xf32>
    %113 = arith.addf %111, %112 : vector<8x128xf32>
    %114 = arith.negf %113 : vector<8x128xf32>
    %115 = math.exp %114 : vector<8x128xf32>
    %cst_27 = arith.constant 1.000000e+00 : f32
    %116 = vector.broadcast %cst_27 : f32 to vector<8x128xf32>
    %117 = arith.addf %116, %115 : vector<8x128xf32>
    %118 = arith.divf %116, %117 : vector<8x128xf32>
    %119 = vector.extract_strided_slice %101 {offsets = [0, 256], sizes = [8, 128], strides = [1, 1]} : vector<8x384xf32> to vector<8x128xf32>
    %120 = vector.extract_strided_slice %102 {offsets = [0, 256], sizes = [8, 128], strides = [1, 1]} : vector<8x384xf32> to vector<8x128xf32>
    %121 = arith.addf %120, %6 : vector<8x128xf32>
    %122 = arith.mulf %110, %121 : vector<8x128xf32>
    %123 = arith.addf %119, %122 : vector<8x128xf32>
    %124 = math.tanh %123 : vector<8x128xf32>
    %125 = arith.subf %97, %124 : vector<8x128xf32>
    %126 = arith.mulf %118, %125 : vector<8x128xf32>
    %127 = arith.addf %124, %126 : vector<8x128xf32>
    %128 = arith.maximumf %98, %127 : vector<8x128xf32>
    %c4_i32 = arith.constant 4 : i32
    %129 = arith.index_cast %c4_i32 : i32 to index
    %c0_28 = arith.constant 0 : index
    %c0_29 = arith.constant 0 : index
    %130 = vector.load %arg2[%129, %c0_28, %c0_29] : memref<8x8x384xf32, #tpu.memory_space<vmem>>, vector<1x8x384xf32>
    %131 = vector.shape_cast %130 : vector<1x8x384xf32> to vector<8x384xf32>
    %cst_30 = arith.constant dense<0.000000e+00> : vector<8x384xf32>
    %132 = tpu.matmul %127, %3, %cst_30 {dimension_numbers = #tpu.dot_dimension_numbers<[1], [0], [0], [1], [0, 0, 1, 1], [], []>} : vector<8x128xf32>, vector<128x384xf32>, vector<8x384xf32> -> vector<8x384xf32>
    %133 = vector.extract_strided_slice %131 {offsets = [0, 0], sizes = [8, 128], strides = [1, 1]} : vector<8x384xf32> to vector<8x128xf32>
    %134 = vector.extract_strided_slice %132 {offsets = [0, 0], sizes = [8, 128], strides = [1, 1]} : vector<8x384xf32> to vector<8x128xf32>
    %135 = arith.addf %133, %134 : vector<8x128xf32>
    %136 = arith.negf %135 : vector<8x128xf32>
    %137 = math.exp %136 : vector<8x128xf32>
    %cst_31 = arith.constant 1.000000e+00 : f32
    %138 = vector.broadcast %cst_31 : f32 to vector<8x128xf32>
    %139 = arith.addf %138, %137 : vector<8x128xf32>
    %140 = arith.divf %138, %139 : vector<8x128xf32>
    %141 = vector.extract_strided_slice %131 {offsets = [0, 128], sizes = [8, 128], strides = [1, 1]} : vector<8x384xf32> to vector<8x128xf32>
    %142 = vector.extract_strided_slice %132 {offsets = [0, 128], sizes = [8, 128], strides = [1, 1]} : vector<8x384xf32> to vector<8x128xf32>
    %143 = arith.addf %141, %142 : vector<8x128xf32>
    %144 = arith.negf %143 : vector<8x128xf32>
    %145 = math.exp %144 : vector<8x128xf32>
    %cst_32 = arith.constant 1.000000e+00 : f32
    %146 = vector.broadcast %cst_32 : f32 to vector<8x128xf32>
    %147 = arith.addf %146, %145 : vector<8x128xf32>
    %148 = arith.divf %146, %147 : vector<8x128xf32>
    %149 = vector.extract_strided_slice %131 {offsets = [0, 256], sizes = [8, 128], strides = [1, 1]} : vector<8x384xf32> to vector<8x128xf32>
    %150 = vector.extract_strided_slice %132 {offsets = [0, 256], sizes = [8, 128], strides = [1, 1]} : vector<8x384xf32> to vector<8x128xf32>
    %151 = arith.addf %150, %6 : vector<8x128xf32>
    %152 = arith.mulf %140, %151 : vector<8x128xf32>
    %153 = arith.addf %149, %152 : vector<8x128xf32>
    %154 = math.tanh %153 : vector<8x128xf32>
    %155 = arith.subf %127, %154 : vector<8x128xf32>
    %156 = arith.mulf %148, %155 : vector<8x128xf32>
    %157 = arith.addf %154, %156 : vector<8x128xf32>
    %158 = arith.maximumf %128, %157 : vector<8x128xf32>
    %c5_i32 = arith.constant 5 : i32
    %159 = arith.index_cast %c5_i32 : i32 to index
    %c0_33 = arith.constant 0 : index
    %c0_34 = arith.constant 0 : index
    %160 = vector.load %arg2[%159, %c0_33, %c0_34] : memref<8x8x384xf32, #tpu.memory_space<vmem>>, vector<1x8x384xf32>
    %161 = vector.shape_cast %160 : vector<1x8x384xf32> to vector<8x384xf32>
    %cst_35 = arith.constant dense<0.000000e+00> : vector<8x384xf32>
    %162 = tpu.matmul %157, %3, %cst_35 {dimension_numbers = #tpu.dot_dimension_numbers<[1], [0], [0], [1], [0, 0, 1, 1], [], []>} : vector<8x128xf32>, vector<128x384xf32>, vector<8x384xf32> -> vector<8x384xf32>
    %163 = vector.extract_strided_slice %161 {offsets = [0, 0], sizes = [8, 128], strides = [1, 1]} : vector<8x384xf32> to vector<8x128xf32>
    %164 = vector.extract_strided_slice %162 {offsets = [0, 0], sizes = [8, 128], strides = [1, 1]} : vector<8x384xf32> to vector<8x128xf32>
    %165 = arith.addf %163, %164 : vector<8x128xf32>
    %166 = arith.negf %165 : vector<8x128xf32>
    %167 = math.exp %166 : vector<8x128xf32>
    %cst_36 = arith.constant 1.000000e+00 : f32
    %168 = vector.broadcast %cst_36 : f32 to vector<8x128xf32>
    %169 = arith.addf %168, %167 : vector<8x128xf32>
    %170 = arith.divf %168, %169 : vector<8x128xf32>
    %171 = vector.extract_strided_slice %161 {offsets = [0, 128], sizes = [8, 128], strides = [1, 1]} : vector<8x384xf32> to vector<8x128xf32>
    %172 = vector.extract_strided_slice %162 {offsets = [0, 128], sizes = [8, 128], strides = [1, 1]} : vector<8x384xf32> to vector<8x128xf32>
    %173 = arith.addf %171, %172 : vector<8x128xf32>
    %174 = arith.negf %173 : vector<8x128xf32>
    %175 = math.exp %174 : vector<8x128xf32>
    %cst_37 = arith.constant 1.000000e+00 : f32
    %176 = vector.broadcast %cst_37 : f32 to vector<8x128xf32>
    %177 = arith.addf %176, %175 : vector<8x128xf32>
    %178 = arith.divf %176, %177 : vector<8x128xf32>
    %179 = vector.extract_strided_slice %161 {offsets = [0, 256], sizes = [8, 128], strides = [1, 1]} : vector<8x384xf32> to vector<8x128xf32>
    %180 = vector.extract_strided_slice %162 {offsets = [0, 256], sizes = [8, 128], strides = [1, 1]} : vector<8x384xf32> to vector<8x128xf32>
    %181 = arith.addf %180, %6 : vector<8x128xf32>
    %182 = arith.mulf %170, %181 : vector<8x128xf32>
    %183 = arith.addf %179, %182 : vector<8x128xf32>
    %184 = math.tanh %183 : vector<8x128xf32>
    %185 = arith.subf %157, %184 : vector<8x128xf32>
    %186 = arith.mulf %178, %185 : vector<8x128xf32>
    %187 = arith.addf %184, %186 : vector<8x128xf32>
    %188 = arith.maximumf %158, %187 : vector<8x128xf32>
    %c6_i32 = arith.constant 6 : i32
    %189 = arith.index_cast %c6_i32 : i32 to index
    %c0_38 = arith.constant 0 : index
    %c0_39 = arith.constant 0 : index
    %190 = vector.load %arg2[%189, %c0_38, %c0_39] : memref<8x8x384xf32, #tpu.memory_space<vmem>>, vector<1x8x384xf32>
    %191 = vector.shape_cast %190 : vector<1x8x384xf32> to vector<8x384xf32>
    %cst_40 = arith.constant dense<0.000000e+00> : vector<8x384xf32>
    %192 = tpu.matmul %187, %3, %cst_40 {dimension_numbers = #tpu.dot_dimension_numbers<[1], [0], [0], [1], [0, 0, 1, 1], [], []>} : vector<8x128xf32>, vector<128x384xf32>, vector<8x384xf32> -> vector<8x384xf32>
    %193 = vector.extract_strided_slice %191 {offsets = [0, 0], sizes = [8, 128], strides = [1, 1]} : vector<8x384xf32> to vector<8x128xf32>
    %194 = vector.extract_strided_slice %192 {offsets = [0, 0], sizes = [8, 128], strides = [1, 1]} : vector<8x384xf32> to vector<8x128xf32>
    %195 = arith.addf %193, %194 : vector<8x128xf32>
    %196 = arith.negf %195 : vector<8x128xf32>
    %197 = math.exp %196 : vector<8x128xf32>
    %cst_41 = arith.constant 1.000000e+00 : f32
    %198 = vector.broadcast %cst_41 : f32 to vector<8x128xf32>
    %199 = arith.addf %198, %197 : vector<8x128xf32>
    %200 = arith.divf %198, %199 : vector<8x128xf32>
    %201 = vector.extract_strided_slice %191 {offsets = [0, 128], sizes = [8, 128], strides = [1, 1]} : vector<8x384xf32> to vector<8x128xf32>
    %202 = vector.extract_strided_slice %192 {offsets = [0, 128], sizes = [8, 128], strides = [1, 1]} : vector<8x384xf32> to vector<8x128xf32>
    %203 = arith.addf %201, %202 : vector<8x128xf32>
    %204 = arith.negf %203 : vector<8x128xf32>
    %205 = math.exp %204 : vector<8x128xf32>
    %cst_42 = arith.constant 1.000000e+00 : f32
    %206 = vector.broadcast %cst_42 : f32 to vector<8x128xf32>
    %207 = arith.addf %206, %205 : vector<8x128xf32>
    %208 = arith.divf %206, %207 : vector<8x128xf32>
    %209 = vector.extract_strided_slice %191 {offsets = [0, 256], sizes = [8, 128], strides = [1, 1]} : vector<8x384xf32> to vector<8x128xf32>
    %210 = vector.extract_strided_slice %192 {offsets = [0, 256], sizes = [8, 128], strides = [1, 1]} : vector<8x384xf32> to vector<8x128xf32>
    %211 = arith.addf %210, %6 : vector<8x128xf32>
    %212 = arith.mulf %200, %211 : vector<8x128xf32>
    %213 = arith.addf %209, %212 : vector<8x128xf32>
    %214 = math.tanh %213 : vector<8x128xf32>
    %215 = arith.subf %187, %214 : vector<8x128xf32>
    %216 = arith.mulf %208, %215 : vector<8x128xf32>
    %217 = arith.addf %214, %216 : vector<8x128xf32>
    %218 = arith.maximumf %188, %217 : vector<8x128xf32>
    %c7_i32 = arith.constant 7 : i32
    %219 = arith.index_cast %c7_i32 : i32 to index
    %c0_43 = arith.constant 0 : index
    %c0_44 = arith.constant 0 : index
    %220 = vector.load %arg2[%219, %c0_43, %c0_44] : memref<8x8x384xf32, #tpu.memory_space<vmem>>, vector<1x8x384xf32>
    %221 = vector.shape_cast %220 : vector<1x8x384xf32> to vector<8x384xf32>
    %cst_45 = arith.constant dense<0.000000e+00> : vector<8x384xf32>
    %222 = tpu.matmul %217, %3, %cst_45 {dimension_numbers = #tpu.dot_dimension_numbers<[1], [0], [0], [1], [0, 0, 1, 1], [], []>} : vector<8x128xf32>, vector<128x384xf32>, vector<8x384xf32> -> vector<8x384xf32>
    %223 = vector.extract_strided_slice %221 {offsets = [0, 0], sizes = [8, 128], strides = [1, 1]} : vector<8x384xf32> to vector<8x128xf32>
    %224 = vector.extract_strided_slice %222 {offsets = [0, 0], sizes = [8, 128], strides = [1, 1]} : vector<8x384xf32> to vector<8x128xf32>
    %225 = arith.addf %223, %224 : vector<8x128xf32>
    %226 = arith.negf %225 : vector<8x128xf32>
    %227 = math.exp %226 : vector<8x128xf32>
    %cst_46 = arith.constant 1.000000e+00 : f32
    %228 = vector.broadcast %cst_46 : f32 to vector<8x128xf32>
    %229 = arith.addf %228, %227 : vector<8x128xf32>
    %230 = arith.divf %228, %229 : vector<8x128xf32>
    %231 = vector.extract_strided_slice %221 {offsets = [0, 128], sizes = [8, 128], strides = [1, 1]} : vector<8x384xf32> to vector<8x128xf32>
    %232 = vector.extract_strided_slice %222 {offsets = [0, 128], sizes = [8, 128], strides = [1, 1]} : vector<8x384xf32> to vector<8x128xf32>
    %233 = arith.addf %231, %232 : vector<8x128xf32>
    %234 = arith.negf %233 : vector<8x128xf32>
    %235 = math.exp %234 : vector<8x128xf32>
    %cst_47 = arith.constant 1.000000e+00 : f32
    %236 = vector.broadcast %cst_47 : f32 to vector<8x128xf32>
    %237 = arith.addf %236, %235 : vector<8x128xf32>
    %238 = arith.divf %236, %237 : vector<8x128xf32>
    %239 = vector.extract_strided_slice %221 {offsets = [0, 256], sizes = [8, 128], strides = [1, 1]} : vector<8x384xf32> to vector<8x128xf32>
    %240 = vector.extract_strided_slice %222 {offsets = [0, 256], sizes = [8, 128], strides = [1, 1]} : vector<8x384xf32> to vector<8x128xf32>
    %241 = arith.addf %240, %6 : vector<8x128xf32>
    %242 = arith.mulf %230, %241 : vector<8x128xf32>
    %243 = arith.addf %239, %242 : vector<8x128xf32>
    %244 = math.tanh %243 : vector<8x128xf32>
    %245 = arith.subf %217, %244 : vector<8x128xf32>
    %246 = arith.mulf %238, %245 : vector<8x128xf32>
    %247 = arith.addf %244, %246 : vector<8x128xf32>
    %248 = arith.maximumf %218, %247 : vector<8x128xf32>
    %c8_i32 = arith.constant 8 : i32
    %c0_48 = arith.constant 0 : index
    %c0_49 = arith.constant 0 : index
    %249 = vector.load %arg6[%c0_48, %c0_49] : memref<8x128xf32, #tpu.memory_space<vmem>>, vector<8x128xf32>
    tpu.vector_store %arg6[%c0_48, %c0_49], %247 {strides = array<i32>} : memref<8x128xf32, #tpu.memory_space<vmem>>, vector<8x128xf32>,
    %c0_50 = arith.constant 0 : index
    %c0_51 = arith.constant 0 : index
    %250 = vector.load %arg5[%c0_50, %c0_51] : memref<8x128xf32, #tpu.memory_space<vmem>>, vector<8x128xf32>
    tpu.vector_store %arg5[%c0_50, %c0_51], %248 {strides = array<i32>} : memref<8x128xf32, #tpu.memory_space<vmem>>, vector<8x128xf32>,
    return
  }
  func.func @transform_0(%arg0: i32, %arg1: i32) -> (i32, i32, i32) {
    %c0_i32 = arith.constant 0 : i32
    %c0_i32_0 = arith.constant 0 : i32
    return %arg1, %arg0, %c0_i32 : i32, i32, i32
  }
  func.func @transform_1(%arg0: i32, %arg1: i32) -> (i32, i32) {
    %c0_i32 = arith.constant 0 : i32
    %c0_i32_0 = arith.constant 0 : i32
    %c0_i32_1 = arith.constant 0 : i32
    return %c0_i32, %c0_i32_0 : i32, i32
  }
  func.func @transform_2(%arg0: i32, %arg1: i32) -> (i32, i32) {
    %c0_i32 = arith.constant 0 : i32
    %c0_i32_0 = arith.constant 0 : i32
    %c0_i32_1 = arith.constant 0 : i32
    return %c0_i32, %c0_i32_0 : i32, i32
  }
  func.func @transform_3(%arg0: i32, %arg1: i32) -> (i32, i32) {
    %c0_i32 = arith.constant 0 : i32
    %c0_i32_0 = arith.constant 0 : i32
    return %arg0, %c0_i32 : i32, i32
  }
}

</mosaic_0001>

<llo_original>
// kernel: my_gru_forward.1
$region0: #{my_gru_forward.1}
  #allocation0 [shape = 'u32[]', space=smem, size = 0x4, offset = 0x4, fixed_abs, tag = 'smem constant byte address 0x4 - core index']
  #allocation1 [shape = 'u32[144,128]{1,0:T(1,128)}', space=vmem, size = 0x12000, scoped, tag = 'internal scratch']
  #allocation2 [shape = 'f32[8,128]{1,0:T(8,128)}', space=vmem, size = 0x1000, scoped, tag = 'scratch operand']
  %s0 = inlined_call_operand.vmem [shape: f32[8,8,384], index: 0, kind: input, shape index: {}]
  %s1 = inlined_call_operand.vmem [shape: f32[128,384], index: 1, kind: input, shape index: {}]
  %s2 = inlined_call_operand.vmem [shape: f32[1,128], index: 2, kind: input, shape index: {}]
  %s3 = inlined_call_operand.vmem [shape: f32[8,128], index: 3, kind: output, shape index: {}]
  %s4 = sld [smem:[#allocation0]]
  $region26: #{my_gru_forward.1} parent=0
    _
  %s6 = ssub.s32 1, %s4
  %s7 = scalar_select 0, %s6, %s4
  // Predicated region
  $region2: #{my_gru_forward.1} parent=0 // pred_check
    _
  $region3: #{my_gru_forward.1} parent=0 // pred_check_branch
    %9 = sbr.rel (0) target = $region5
  $region4: #{my_gru_forward.1} parent=0 // pred_region
    _
  $region5: #{my_gru_forward.1} parent=0 // pred_fallthru
    _
  // Predicated region
  $region6: #{my_gru_forward.1} parent=0 // pred_check
    _
  $region7: #{my_gru_forward.1} parent=0 // pred_check_branch
    %11 = sbr.rel (0) target = $region9
  $region8: #{my_gru_forward.1} parent=0 // pred_region
    _
  $region9: #{my_gru_forward.1} parent=0 // pred_fallthru
    _
  // Predicated region
  $region10: #{my_gru_forward.1} parent=0 // pred_check
    _
  $region11: #{my_gru_forward.1} parent=0 // pred_check_branch
    %13 = sbr.rel (0) target = $region13
  $region12: #{my_gru_forward.1} parent=0 // pred_region
    _
  $region13: #{my_gru_forward.1} parent=0 // pred_fallthru
    _
  %p14 = scmp.eq.s32.totalorder 0, 0
  // Predicated region
  $region14: #{my_gru_forward.1} parent=0 // pred_check
    %p15 = pneg %p14
  $region15: #{my_gru_forward.1} parent=0 // pred_check_branch
    %17 = sbr.rel (%p15) target = $region17
  $region16: #{my_gru_forward.1} parent=0 // pred_region
    %18 = vst [vmem:[#allocation2] sm:$0xff] 0.0
    %19 = vst [vmem:[%s3] sm:$0xff] -inf
  $region17: #{my_gru_forward.1} parent=0 // pred_fallthru
    _
  %v20 = vld [vmem:[%s1] sm:$0xff]
  %v21 = vld [vmem:[%s1 + $0x8] sm:$0xff]
  %v22 = vld [vmem:[%s1 + $0x10] sm:$0xff]
  %v23 = vld [vmem:[%s1 + $0x18] sm:$0xff]
  %v24 = vld [vmem:[%s1 + $0x20] sm:$0xff]
  %v25 = vld [vmem:[%s1 + $0x28] sm:$0xff]
  %v26 = vld [vmem:[%s1 + $0x30] sm:$0xff]
  %v27 = vld [vmem:[%s1 + $0x38] sm:$0xff]
  %v28 = vld [vmem:[%s1 + $0x40] sm:$0xff]
  %v29 = vld [vmem:[%s1 + $0x48] sm:$0xff]
  %v30 = vld [vmem:[%s1 + $0x50] sm:$0xff]
  %v31 = vld [vmem:[%s1 + $0x58] sm:$0xff]
  %v32 = vld [vmem:[%s1 + $0x60] sm:$0xff]
  %v33 = vld [vmem:[%s1 + $0x68] sm:$0xff]
  %v34 = vld [vmem:[%s1 + $0x70] sm:$0xff]
  %v35 = vld [vmem:[%s1 + $0x78] sm:$0xff]
  %v36 = vld [vmem:[%s1 + $0x80] sm:$0xff]
  %v37 = vld [vmem:[%s1 + $0x88] sm:$0xff]
  %v38 = vld [vmem:[%s1 + $0x90] sm:$0xff]
  %v39 = vld [vmem:[%s1 + $0x98] sm:$0xff]
  %v40 = vld [vmem:[%s1 + $0xa0] sm:$0xff]
  %v41 = vld [vmem:[%s1 + $0xa8] sm:$0xff]
  %v42 = vld [vmem:[%s1 + $0xb0] sm:$0xff]
  %v43 = vld [vmem:[%s1 + $0xb8] sm:$0xff]
  %v44 = vld [vmem:[%s1 + $0xc0] sm:$0xff]
  %v45 = vld [vmem:[%s1 + $0xc8] sm:$0xff]
  %v46 = vld [vmem:[%s1 + $0xd0] sm:$0xff]
  %v47 = vld [vmem:[%s1 + $0xd8] sm:$0xff]
  %v48 = vld [vmem:[%s1 + $0xe0] sm:$0xff]
  %v49 = vld [vmem:[%s1 + $0xe8] sm:$0xff]
  %v50 = vld [vmem:[%s1 + $0xf0] sm:$0xff]
  %v51 = vld [vmem:[%s1 + $0xf8] sm:$0xff]
  %v52 = vld [vmem:[%s1 + $0x100] sm:$0xff]
  %v53 = vld [vmem:[%s1 + $0x108] sm:$0xff]
  %v54 = vld [vmem:[%s1 + $0x110] sm:$0xff]
  %v55 = vld [vmem:[%s1 + $0x118] sm:$0xff]
  %v56 = vld [vmem:[%s1 + $0x120] sm:$0xff]
  %v57 = vld [vmem:[%s1 + $0x128] sm:$0xff]
  %v58 = vld [vmem:[%s1 + $0x130] sm:$0xff]
  %v59 = vld [vmem:[%s1 + $0x138] sm:$0xff]
  %v60 = vld [vmem:[%s1 + $0x140] sm:$0xff]
  %v61 = vld [vmem:[%s1 + $0x148] sm:$0xff]
  %v62 = vld [vmem:[%s1 + $0x150] sm:$0xff]
  %v63 = vld [vmem:[%s1 + $0x158] sm:$0xff]
  %v64 = vld [vmem:[%s1 + $0x160] sm:$0xff]
  %v65 = vld [vmem:[%s1 + $0x168] sm:$0xff]
  %v66 = vld [vmem:[%s1 + $0x170] sm:$0xff]
  %v67 = vld [vmem:[%s1 + $0x178] sm:$0xff]
  %v68 = vld [vmem:[%s2] sm:$0x1]
  %v70 = vlaneseq
  %v71 = vshrl.u32 %v70, 7
  %v72 = vsub.s32 0, %v71
  %v73 = vrot.slane %v68, %v72
  %v75 = vld [vmem:[#allocation2] sm:$0xff]
  %v76 = vld [vmem:[%s3] sm:$0xff]
  %v77 = vld [vmem:[%s0] sm:$0xff]
  %v78 = vld [vmem:[%s0 + $0x8] sm:$0xff]
  %v79 = vld [vmem:[%s0 + $0x10] sm:$0xff]
  %80 = vmatprep.subr.mxu0 %v66
  %81 = vmatpush1.msra.mxu0 %v65
  %82 = vmatprep.subr.mxu0 %v63
  %83 = vmatpush1.msra.mxu0 %v62
  %84 = vmatprep.subr.mxu0 %v60
  %85 = vmatpush1.msra.mxu0 %v59
  %86 = vmatprep.subr.mxu0 %v57
  %87 = vmatpush1.msra.mxu0 %v56
  %88 = vmatprep.subr.mxu0 %v54
  %89 = vmatpush1.msra.mxu0 %v53
  %90 = vmatprep.subr.mxu0 %v51
  %91 = vmatpush1.msra.mxu0 %v50
  %92 = vmatprep.subr.mxu0 %v48
  %93 = vmatpush1.msra.mxu0 %v47
  %94 = vmatprep.subr.mxu0 %v45
  %95 = vmatpush1.msra.mxu0 %v44
  %96 = vmatprep.subr.mxu0 %v42
  %97 = vmatpush1.msra.mxu0 %v41
  %98 = vmatprep.subr.mxu0 %v39
  %99 = vmatpush1.msra.mxu0 %v38
  %100 = vmatprep.subr.mxu0 %v36
  %101 = vmatpush1.msra.mxu0 %v35
  %102 = vmatprep.subr.mxu0 %v33
  %103 = vmatpush1.msra.mxu0 %v32
  %104 = vmatprep.subr.mxu0 %v30
  %105 = vmatpush1.msra.mxu0 %v29
  %106 = vmatprep.subr.mxu0 %v27
  %107 = vmatpush1.msra.mxu0 %v26
  %108 = vmatprep.subr.mxu0 %v24
  %109 = vmatpush1.msra.mxu0 %v23
  %110 = vmatprep.subr.mxu0 %v21
  %111 = vmatpush1.msra.mxu0 %v20
  %112 = vmatprep.subr.mxu0 0.0
  %113 = vmatpush2.msra.mxu0 0.0
  %114 = vmatprep.subr.mxu0 0.0
  %115 = vmatpush2.msra.mxu0 0.0
  %116 = vmatprep.subr.mxu0 0.0
  %117 = vmatpush2.msra.mxu0 0.0
  %118 = vmatprep.subr.mxu0 0.0
  %119 = vmatpush2.msra.mxu0 0.0
  %120 = vmatprep.subr.mxu0 0.0
  %121 = vmatpush2.msra.mxu0 0.0
  %122 = vmatprep.subr.mxu0 0.0
  %123 = vmatpush2.msra.mxu0 0.0
  %124 = vmatprep.subr.mxu0 0.0
  %125 = vmatpush2.msra.mxu0 0.0
  %126 = vmatprep.subr.mxu0 0.0
  %127 = vmatpush2.msra.mxu0 0.0
  %128 = vmatprep.subr.mxu0 0.0
  %129 = vmatpush2.msra.mxu0 0.0
  %130 = vmatprep.subr.mxu0 0.0
  %131 = vmatpush2.msra.mxu0 0.0
  %132 = vmatprep.subr.mxu0 0.0
  %133 = vmatpush2.msra.mxu0 0.0
  %134 = vmatprep.subr.mxu0 0.0
  %135 = vmatpush2.msra.mxu0 0.0
  %136 = vmatprep.subr.mxu0 0.0
  %137 = vmatpush2.msra.mxu0 0.0
  %138 = vmatprep.subr.mxu0 0.0
  %139 = vmatpush2.msra.mxu0 0.0
  %140 = vmatprep.subr.mxu0 0.0
  %141 = vmatpush2.msra.mxu0 0.0
  %142 = vmatprep.subr.mxu0 0.0
  %143 = vmatpush2.msra.mxu0 0.0
  %144 = vmatprep.mubr.f32.mxu0 0.0
  %145 = vmatmul.mubr.f32.gmra.mxu0 %v75
  %v146 = vpop.f32.mrf.mxu0
  %v147 = vadd.f32 0.0, %v146
  %v148 = vpop.f32.mrf.mxu0
  %v149 = vadd.f32 0.0, %v148
  %150 = vdwg.mxu0
  %151 = vmatprep.subr.mxu0 0.0
  %152 = vmatpush1.msra.mxu0 %v67
  %153 = vmatprep.subr.mxu0 0.0
  %154 = vmatpush1.msra.mxu0 %v64
  %155 = vmatprep.subr.mxu0 0.0
  %156 = vmatpush1.msra.mxu0 %v61
  %157 = vmatprep.subr.mxu0 0.0
  %158 = vmatpush1.msra.mxu0 %v58
  %159 = vmatprep.subr.mxu0 0.0
  %160 = vmatpush1.msra.mxu0 %v55
  %161 = vmatprep.subr.mxu0 0.0
  %162 = vmatpush1.msra.mxu0 %v52
  %163 = vmatprep.subr.mxu0 0.0
  %164 = vmatpush1.msra.mxu0 %v49
  %165 = vmatprep.subr.mxu0 0.0
  %166 = vmatpush1.msra.mxu0 %v46
  %167 = vmatprep.subr.mxu0 0.0
  %168 = vmatpush1.msra.mxu0 %v43
  %169 = vmatprep.subr.mxu0 0.0
  %170 = vmatpush1.msra.mxu0 %v40
  %171 = vmatprep.subr.mxu0 0.0
  %172 = vmatpush1.msra.mxu0 %v37
  %173 = vmatprep.subr.mxu0 0.0
  %174 = vmatpush1.msra.mxu0 %v34
  %175 = vmatprep.subr.mxu0 0.0
  %176 = vmatpush1.msra.mxu0 %v31
  %177 = vmatprep.subr.mxu0 0.0
  %178 = vmatpush1.msra.mxu0 %v28
  %179 = vmatprep.subr.mxu0 0.0
  %180 = vmatpush1.msra.mxu0 %v25
  %181 = vmatprep.subr.mxu0 0.0
  %182 = vmatpush1.msra.mxu0 %v22
  %183 = vmatprep.subr.mxu0 0.0
  %184 = vmatpush2.msra.mxu0 0.0
  %185 = vmatprep.subr.mxu0 0.0
  %186 = vmatpush2.msra.mxu0 0.0
  %187 = vmatprep.subr.mxu0 0.0
  %188 = vmatpush2.msra.mxu0 0.0
  %189 = vmatprep.subr.mxu0 0.0
  %190 = vmatpush2.msra.mxu0 0.0
  %191 = vmatprep.subr.mxu0 0.0
  %192 = vmatpush2.msra.mxu0 0.0
  %193 = vmatprep.subr.mxu0 0.0
  %194 = vmatpush2.msra.mxu0 0.0
  %195 = vmatprep.subr.mxu0 0.0
  %196 = vmatpush2.msra.mxu0 0.0
  %197 = vmatprep.subr.mxu0 0.0
  %198 = vmatpush2.msra.mxu0 0.0
  %199 = vmatprep.subr.mxu0 0.0
  %200 = vmatpush2.msra.mxu0 0.0
  %201 = vmatprep.subr.mxu0 0.0
  %202 = vmatpush2.msra.mxu0 0.0
  %203 = vmatprep.subr.mxu0 0.0
  %204 = vmatpush2.msra.mxu0 0.0
  %205 = vmatprep.subr.mxu0 0.0
  %206 = vmatpush2.msra.mxu0 0.0
  %207 = vmatprep.subr.mxu0 0.0
  %208 = vmatpush2.msra.mxu0 0.0
  %209 = vmatprep.subr.mxu0 0.0
  %210 = vmatpush2.msra.mxu0 0.0
  %211 = vmatprep.subr.mxu0 0.0
  %212 = vmatpush2.msra.mxu0 0.0
  %213 = vmatprep.subr.mxu0 0.0
  %214 = vmatpush2.msra.mxu0 0.0
  %215 = vmatprep.mubr.f32.mxu0 0.0
  %216 = vmatmul.mubr.f32.gmra.mxu0 %v75
  %v217 = vpop.f32.mrf.mxu0
  %v218 = vadd.f32 0.0, %v217
  %v219 = vpop.f32.mrf.mxu0
  %220 = vdwg.mxu0
  %v221 = vadd.f32 %v77, %v147
  %v222 = vxor.u32 %v221, 2147483648
  %v223 = vmul.f32 %v222, 1.442695
  %v224 = vpow.pop %v223
  %v225 = vadd.f32 %v224, 1.0
  %v226 = vrcp.pop %v225
  %v227 = vmul.f32 1.0, %v226
  %v228 = vadd.f32 %v78, %v149
  %v229 = vxor.u32 %v228, 2147483648
  %v230 = vmul.f32 %v229, 1.442695
  %v231 = vpow.pop %v230
  %v232 = vadd.f32 %v231, 1.0
  %v233 = vrcp.pop %v232
  %v234 = vmul.f32 1.0, %v233
  %v235 = vadd.f32 %v218, %v73
  %v236 = vmul.f32 %v227, %v235
  %v237 = vadd.f32 %v79, %v236
  %v238 = vtanh.pop %v237
  %v239 = vsub.f32 %v75, %v238
  %v240 = vmul.f32 %v234, %v239
  %v241 = vadd.f32 %v238, %v240
  %v242 = vmax.f32 %v76, %v241
  %s243 = scalar_lea.vmem %s0, 24
  %v244 = vld [vmem:[%s243] sm:$0xff]
  %v245 = vld [vmem:[%s243 + $0x8] sm:$0xff]
  %v246 = vld [vmem:[%s243 + $0x10] sm:$0xff]
  %247 = vmatprep.subr.mxu0 %v66
  %248 = vmatpush1.msra.mxu0 %v65
  %249 = vmatprep.subr.mxu0 %v63
  %250 = vmatpush1.msra.mxu0 %v62
  %251 = vmatprep.subr.mxu0 %v60
  %252 = vmatpush1.msra.mxu0 %v59
  %253 = vmatprep.subr.mxu0 %v57
  %254 = vmatpush1.msra.mxu0 %v56
  %255 = vmatprep.subr.mxu0 %v54
  %256 = vmatpush1.msra.mxu0 %v53
  %257 = vmatprep.subr.mxu0 %v51
  %258 = vmatpush1.msra.mxu0 %v50
  %259 = vmatprep.subr.mxu0 %v48
  %260 = vmatpush1.msra.mxu0 %v47
  %261 = vmatprep.subr.mxu0 %v45
  %262 = vmatpush1.msra.mxu0 %v44
  %263 = vmatprep.subr.mxu0 %v42
  %264 = vmatpush1.msra.mxu0 %v41
  %265 = vmatprep.subr.mxu0 %v39
  %266 = vmatpush1.msra.mxu0 %v38
  %267 = vmatprep.subr.mxu0 %v36
  %268 = vmatpush1.msra.mxu0 %v35
  %269 = vmatprep.subr.mxu0 %v33
  %270 = vmatpush1.msra.mxu0 %v32
  %271 = vmatprep.subr.mxu0 %v30
  %272 = vmatpush1.msra.mxu0 %v29
  %273 = vmatprep.subr.mxu0 %v27
  %274 = vmatpush1.msra.mxu0 %v26
  %275 = vmatprep.subr.mxu0 %v24
  %276 = vmatpush1.msra.mxu0 %v23
  %277 = vmatprep.subr.mxu0 %v21
  %278 = vmatpush1.msra.mxu0 %v20
  %279 = vmatprep.subr.mxu0 0.0
  %280 = vmatpush2.msra.mxu0 0.0
  %281 = vmatprep.subr.mxu0 0.0
  %282 = vmatpush2.msra.mxu0 0.0
  %283 = vmatprep.subr.mxu0 0.0
  %284 = vmatpush2.msra.mxu0 0.0
  %285 = vmatprep.subr.mxu0 0.0
  %286 = vmatpush2.msra.mxu0 0.0
  %287 = vmatprep.subr.mxu0 0.0
  %288 = vmatpush2.msra.mxu0 0.0
  %289 = vmatprep.subr.mxu0 0.0
  %290 = vmatpush2.msra.mxu0 0.0
  %291 = vmatprep.subr.mxu0 0.0
  %292 = vmatpush2.msra.mxu0 0.0
  %293 = vmatprep.subr.mxu0 0.0
  %294 = vmatpush2.msra.mxu0 0.0
  %295 = vmatprep.subr.mxu0 0.0
  %296 = vmatpush2.msra.mxu0 0.0
  %297 = vmatprep.subr.mxu0 0.0
  %298 = vmatpush2.msra.mxu0 0.0
  %299 = vmatprep.subr.mxu0 0.0
  %300 = vmatpush2.msra.mxu0 0.0
  %301 = vmatprep.subr.mxu0 0.0
  %302 = vmatpush2.msra.mxu0 0.0
  %303 = vmatprep.subr.mxu0 0.0
  %304 = vmatpush2.msra.mxu0 0.0
  %305 = vmatprep.subr.mxu0 0.0
  %306 = vmatpush2.msra.mxu0 0.0
  %307 = vmatprep.subr.mxu0 0.0
  %308 = vmatpush2.msra.mxu0 0.0
  %309 = vmatprep.subr.mxu0 0.0
  %310 = vmatpush2.msra.mxu0 0.0
  %311 = vmatprep.mubr.f32.mxu0 0.0
  %312 = vmatmul.mubr.f32.gmra.mxu0 %v241
  %v313 = vpop.f32.mrf.mxu0
  %v314 = vadd.f32 0.0, %v313
  %v315 = vpop.f32.mrf.mxu0
  %v316 = vadd.f32 0.0, %v315
  %317 = vdwg.mxu0
  %318 = vmatprep.subr.mxu0 0.0
  %319 = vmatpush1.msra.mxu0 %v67
  %320 = vmatprep.subr.mxu0 0.0
  %321 = vmatpush1.msra.mxu0 %v64
  %322 = vmatprep.subr.mxu0 0.0
  %323 = vmatpush1.msra.mxu0 %v61
  %324 = vmatprep.subr.mxu0 0.0
  %325 = vmatpush1.msra.mxu0 %v58
  %326 = vmatprep.subr.mxu0 0.0
  %327 = vmatpush1.msra.mxu0 %v55
  %328 = vmatprep.subr.mxu0 0.0
  %329 = vmatpush1.msra.mxu0 %v52
  %330 = vmatprep.subr.mxu0 0.0
  %331 = vmatpush1.msra.mxu0 %v49
  %332 = vmatprep.subr.mxu0 0.0
  %333 = vmatpush1.msra.mxu0 %v46
  %334 = vmatprep.subr.mxu0 0.0
  %335 = vmatpush1.msra.mxu0 %v43
  %336 = vmatprep.subr.mxu0 0.0
  %337 = vmatpush1.msra.mxu0 %v40
  %338 = vmatprep.subr.mxu0 0.0
  %339 = vmatpush1.msra.mxu0 %v37
  %340 = vmatprep.subr.mxu0 0.0
  %341 = vmatpush1.msra.mxu0 %v34
  %342 = vmatprep.subr.mxu0 0.0
  %343 = vmatpush1.msra.mxu0 %v31
  %344 = vmatprep.subr.mxu0 0.0
  %345 = vmatpush1.msra.mxu0 %v28
  %346 = vmatprep.subr.mxu0 0.0
  %347 = vmatpush1.msra.mxu0 %v25
  %348 = vmatprep.subr.mxu0 0.0
  %349 = vmatpush1.msra.mxu0 %v22
  %350 = vmatprep.subr.mxu0 0.0
  %351 = vmatpush2.msra.mxu0 0.0
  %352 = vmatprep.subr.mxu0 0.0
  %353 = vmatpush2.msra.mxu0 0.0
  %354 = vmatprep.subr.mxu0 0.0
  %355 = vmatpush2.msra.mxu0 0.0
  %356 = vmatprep.subr.mxu0 0.0
  %357 = vmatpush2.msra.mxu0 0.0
  %358 = vmatprep.subr.mxu0 0.0
  %359 = vmatpush2.msra.mxu0 0.0
  %360 = vmatprep.subr.mxu0 0.0
  %361 = vmatpush2.msra.mxu0 0.0
  %362 = vmatprep.subr.mxu0 0.0
  %363 = vmatpush2.msra.mxu0 0.0
  %364 = vmatprep.subr.mxu0 0.0
  %365 = vmatpush2.msra.mxu0 0.0
  %366 = vmatprep.subr.mxu0 0.0
  %367 = vmatpush2.msra.mxu0 0.0
  %368 = vmatprep.subr.mxu0 0.0
  %369 = vmatpush2.msra.mxu0 0.0
  %370 = vmatprep.subr.mxu0 0.0
  %371 = vmatpush2.msra.mxu0 0.0
  %372 = vmatprep.subr.mxu0 0.0
  %373 = vmatpush2.msra.mxu0 0.0
  %374 = vmatprep.subr.mxu0 0.0
  %375 = vmatpush2.msra.mxu0 0.0
  %376 = vmatprep.subr.mxu0 0.0
  %377 = vmatpush2.msra.mxu0 0.0
  %378 = vmatprep.subr.mxu0 0.0
  %379 = vmatpush2.msra.mxu0 0.0
  %380 = vmatprep.subr.mxu0 0.0
  %381 = vmatpush2.msra.mxu0 0.0
  %382 = vmatprep.mubr.f32.mxu0 0.0
  %383 = vmatmul.mubr.f32.gmra.mxu0 %v241
  %v384 = vpop.f32.mrf.mxu0
  %v385 = vadd.f32 0.0, %v384
  %v386 = vpop.f32.mrf.mxu0
  %387 = vdwg.mxu0
  %v388 = vadd.f32 %v244, %v314
  %v389 = vxor.u32 %v388, 2147483648
  %v390 = vmul.f32 %v389, 1.442695
  %v391 = vpow.pop %v390
  %v392 = vadd.f32 %v391, 1.0
  %v393 = vrcp.pop %v392
  %v394 = vmul.f32 1.0, %v393
  %v395 = vadd.f32 %v245, %v316
  %v396 = vxor.u32 %v395, 2147483648
  %v397 = vmul.f32 %v396, 1.442695
  %v398 = vpow.pop %v397
  %v399 = vadd.f32 %v398, 1.0
  %v400 = vrcp.pop %v399
  %v401 = vmul.f32 1.0, %v400
  %v402 = vadd.f32 %v385, %v73
  %v403 = vmul.f32 %v394, %v402
  %v404 = vadd.f32 %v246, %v403
  %v405 = vtanh.pop %v404
  %v406 = vsub.f32 %v241, %v405
  %v407 = vmul.f32 %v401, %v406
  %v408 = vadd.f32 %v405, %v407
  %v409 = vmax.f32 %v242, %v408
  %s410 = scalar_lea.vmem %s0, 48
  %v411 = vld [vmem:[%s410] sm:$0xff]
  %v412 = vld [vmem:[%s410 + $0x8] sm:$0xff]
  %v413 = vld [vmem:[%s410 + $0x10] sm:$0xff]
  %414 = vmatprep.subr.mxu0 %v66
  %415 = vmatpush1.msra.mxu0 %v65
  %416 = vmatprep.subr.mxu0 %v63
  %417 = vmatpush1.msra.mxu0 %v62
  %418 = vmatprep.subr.mxu0 %v60
  %419 = vmatpush1.msra.mxu0 %v59
  %420 = vmatprep.subr.mxu0 %v57
  %421 = vmatpush1.msra.mxu0 %v56
  %422 = vmatprep.subr.mxu0 %v54
  %423 = vmatpush1.msra.mxu0 %v53
  %424 = vmatprep.subr.mxu0 %v51
  %425 = vmatpush1.msra.mxu0 %v50
  %426 = vmatprep.subr.mxu0 %v48
  %427 = vmatpush1.msra.mxu0 %v47
  %428 = vmatprep.subr.mxu0 %v45
  %429 = vmatpush1.msra.mxu0 %v44
  %430 = vmatprep.subr.mxu0 %v42
  %431 = vmatpush1.msra.mxu0 %v41
  %432 = vmatprep.subr.mxu0 %v39
  %433 = vmatpush1.msra.mxu0 %v38
  %434 = vmatprep.subr.mxu0 %v36
  %435 = vmatpush1.msra.mxu0 %v35
  %436 = vmatprep.subr.mxu0 %v33
  %437 = vmatpush1.msra.mxu0 %v32
  %438 = vmatprep.subr.mxu0 %v30
  %439 = vmatpush1.msra.mxu0 %v29
  %440 = vmatprep.subr.mxu0 %v27
  %441 = vmatpush1.msra.mxu0 %v26
  %442 = vmatprep.subr.mxu0 %v24
  %443 = vmatpush1.msra.mxu0 %v23
  %444 = vmatprep.subr.mxu0 %v21
  %445 = vmatpush1.msra.mxu0 %v20
  %446 = vmatprep.subr.mxu0 0.0
  %447 = vmatpush2.msra.mxu0 0.0
  %448 = vmatprep.subr.mxu0 0.0
  %449 = vmatpush2.msra.mxu0 0.0
  %450 = vmatprep.subr.mxu0 0.0
  %451 = vmatpush2.msra.mxu0 0.0
  %452 = vmatprep.subr.mxu0 0.0
  %453 = vmatpush2.msra.mxu0 0.0
  %454 = vmatprep.subr.mxu0 0.0
  %455 = vmatpush2.msra.mxu0 0.0
  %456 = vmatprep.subr.mxu0 0.0
  %457 = vmatpush2.msra.mxu0 0.0
  %458 = vmatprep.subr.mxu0 0.0
  %459 = vmatpush2.msra.mxu0 0.0
  %460 = vmatprep.subr.mxu0 0.0
  %461 = vmatpush2.msra.mxu0 0.0
  %462 = vmatprep.subr.mxu0 0.0
  %463 = vmatpush2.msra.mxu0 0.0
  %464 = vmatprep.subr.mxu0 0.0
  %465 = vmatpush2.msra.mxu0 0.0
  %466 = vmatprep.subr.mxu0 0.0
  %467 = vmatpush2.msra.mxu0 0.0
  %468 = vmatprep.subr.mxu0 0.0
  %469 = vmatpush2.msra.mxu0 0.0
  %470 = vmatprep.subr.mxu0 0.0
  %471 = vmatpush2.msra.mxu0 0.0
  %472 = vmatprep.subr.mxu0 0.0
  %473 = vmatpush2.msra.mxu0 0.0
  %474 = vmatprep.subr.mxu0 0.0
  %475 = vmatpush2.msra.mxu0 0.0
  %476 = vmatprep.subr.mxu0 0.0
  %477 = vmatpush2.msra.mxu0 0.0
  %478 = vmatprep.mubr.f32.mxu0 0.0
  %479 = vmatmul.mubr.f32.gmra.mxu0 %v408
  %v480 = vpop.f32.mrf.mxu0
  %v481 = vadd.f32 0.0, %v480
  %v482 = vpop.f32.mrf.mxu0
  %v483 = vadd.f32 0.0, %v482
  %484 = vdwg.mxu0
  %485 = vmatprep.subr.mxu0 0.0
  %486 = vmatpush1.msra.mxu0 %v67
  %487 = vmatprep.subr.mxu0 0.0
  %488 = vmatpush1.msra.mxu0 %v64
  %489 = vmatprep.subr.mxu0 0.0
  %490 = vmatpush1.msra.mxu0 %v61
  %491 = vmatprep.subr.mxu0 0.0
  %492 = vmatpush1.msra.mxu0 %v58
  %493 = vmatprep.subr.mxu0 0.0
  %494 = vmatpush1.msra.mxu0 %v55
  %495 = vmatprep.subr.mxu0 0.0
  %496 = vmatpush1.msra.mxu0 %v52
  %497 = vmatprep.subr.mxu0 0.0
  %498 = vmatpush1.msra.mxu0 %v49
  %499 = vmatprep.subr.mxu0 0.0
  %500 = vmatpush1.msra.mxu0 %v46
  %501 = vmatprep.subr.mxu0 0.0
  %502 = vmatpush1.msra.mxu0 %v43
  %503 = vmatprep.subr.mxu0 0.0
  %504 = vmatpush1.msra.mxu0 %v40
  %505 = vmatprep.subr.mxu0 0.0
  %506 = vmatpush1.msra.mxu0 %v37
  %507 = vmatprep.subr.mxu0 0.0
  %508 = vmatpush1.msra.mxu0 %v34
  %509 = vmatprep.subr.mxu0 0.0
  %510 = vmatpush1.msra.mxu0 %v31
  %511 = vmatprep.subr.mxu0 0.0
  %512 = vmatpush1.msra.mxu0 %v28
  %513 = vmatprep.subr.mxu0 0.0
  %514 = vmatpush1.msra.mxu0 %v25
  %515 = vmatprep.subr.mxu0 0.0
  %516 = vmatpush1.msra.mxu0 %v22
  %517 = vmatprep.subr.mxu0 0.0
  %518 = vmatpush2.msra.mxu0 0.0
  %519 = vmatprep.subr.mxu0 0.0
  %520 = vmatpush2.msra.mxu0 0.0
  %521 = vmatprep.subr.mxu0 0.0
  %522 = vmatpush2.msra.mxu0 0.0
  %523 = vmatprep.subr.mxu0 0.0
  %524 = vmatpush2.msra.mxu0 0.0
  %525 = vmatprep.subr.mxu0 0.0
  %526 = vmatpush2.msra.mxu0 0.0
  %527 = vmatprep.subr.mxu0 0.0
  %528 = vmatpush2.msra.mxu0 0.0
  %529 = vmatprep.subr.mxu0 0.0
  %530 = vmatpush2.msra.mxu0 0.0
  %531 = vmatprep.subr.mxu0 0.0
  %532 = vmatpush2.msra.mxu0 0.0
  %533 = vmatprep.subr.mxu0 0.0
  %534 = vmatpush2.msra.mxu0 0.0
  %535 = vmatprep.subr.mxu0 0.0
  %536 = vmatpush2.msra.mxu0 0.0
  %537 = vmatprep.subr.mxu0 0.0
  %538 = vmatpush2.msra.mxu0 0.0
  %539 = vmatprep.subr.mxu0 0.0
  %540 = vmatpush2.msra.mxu0 0.0
  %541 = vmatprep.subr.mxu0 0.0
  %542 = vmatpush2.msra.mxu0 0.0
  %543 = vmatprep.subr.mxu0 0.0
  %544 = vmatpush2.msra.mxu0 0.0
  %545 = vmatprep.subr.mxu0 0.0
  %546 = vmatpush2.msra.mxu0 0.0
  %547 = vmatprep.subr.mxu0 0.0
  %548 = vmatpush2.msra.mxu0 0.0
  %549 = vmatprep.mubr.f32.mxu0 0.0
  %550 = vmatmul.mubr.f32.gmra.mxu0 %v408
  %v551 = vpop.f32.mrf.mxu0
  %v552 = vadd.f32 0.0, %v551
  %v553 = vpop.f32.mrf.mxu0
  %554 = vdwg.mxu0
  %v555 = vadd.f32 %v411, %v481
  %v556 = vxor.u32 %v555, 2147483648
  %v557 = vmul.f32 %v556, 1.442695
  %v558 = vpow.pop %v557
  %v559 = vadd.f32 %v558, 1.0
  %v560 = vrcp.pop %v559
  %v561 = vmul.f32 1.0, %v560
  %v562 = vadd.f32 %v412, %v483
  %v563 = vxor.u32 %v562, 2147483648
  %v564 = vmul.f32 %v563, 1.442695
  %v565 = vpow.pop %v564
  %v566 = vadd.f32 %v565, 1.0
  %v567 = vrcp.pop %v566
  %v568 = vmul.f32 1.0, %v567
  %v569 = vadd.f32 %v552, %v73
  %v570 = vmul.f32 %v561, %v569
  %v571 = vadd.f32 %v413, %v570
  %v572 = vtanh.pop %v571
  %v573 = vsub.f32 %v408, %v572
  %v574 = vmul.f32 %v568, %v573
  %v575 = vadd.f32 %v572, %v574
  %v576 = vmax.f32 %v409, %v575
  %s577 = scalar_lea.vmem %s0, 72
  %v578 = vld [vmem:[%s577] sm:$0xff]
  %v579 = vld [vmem:[%s577 + $0x8] sm:$0xff]
  %v580 = vld [vmem:[%s577 + $0x10] sm:$0xff]
  %581 = vmatprep.subr.mxu0 %v66
  %582 = vmatpush1.msra.mxu0 %v65
  %583 = vmatprep.subr.mxu0 %v63
  %584 = vmatpush1.msra.mxu0 %v62
  %585 = vmatprep.subr.mxu0 %v60
  %586 = vmatpush1.msra.mxu0 %v59
  %587 = vmatprep.subr.mxu0 %v57
  %588 = vmatpush1.msra.mxu0 %v56
  %589 = vmatprep.subr.mxu0 %v54
  %590 = vmatpush1.msra.mxu0 %v53
  %591 = vmatprep.subr.mxu0 %v51
  %592 = vmatpush1.msra.mxu0 %v50
  %593 = vmatprep.subr.mxu0 %v48
  %594 = vmatpush1.msra.mxu0 %v47
  %595 = vmatprep.subr.mxu0 %v45
  %596 = vmatpush1.msra.mxu0 %v44
  %597 = vmatprep.subr.mxu0 %v42
  %598 = vmatpush1.msra.mxu0 %v41
  %599 = vmatprep.subr.mxu0 %v39
  %600 = vmatpush1.msra.mxu0 %v38
  %601 = vmatprep.subr.mxu0 %v36
  %602 = vmatpush1.msra.mxu0 %v35
  %603 = vmatprep.subr.mxu0 %v33
  %604 = vmatpush1.msra.mxu0 %v32
  %605 = vmatprep.subr.mxu0 %v30
  %606 = vmatpush1.msra.mxu0 %v29
  %607 = vmatprep.subr.mxu0 %v27
  %608 = vmatpush1.msra.mxu0 %v26
  %609 = vmatprep.subr.mxu0 %v24
  %610 = vmatpush1.msra.mxu0 %v23
  %611 = vmatprep.subr.mxu0 %v21
  %612 = vmatpush1.msra.mxu0 %v20
  %613 = vmatprep.subr.mxu0 0.0
  %614 = vmatpush2.msra.mxu0 0.0
  %615 = vmatprep.subr.mxu0 0.0
  %616 = vmatpush2.msra.mxu0 0.0
  %617 = vmatprep.subr.mxu0 0.0
  %618 = vmatpush2.msra.mxu0 0.0
  %619 = vmatprep.subr.mxu0 0.0
  %620 = vmatpush2.msra.mxu0 0.0
  %621 = vmatprep.subr.mxu0 0.0
  %622 = vmatpush2.msra.mxu0 0.0
  %623 = vmatprep.subr.mxu0 0.0
  %624 = vmatpush2.msra.mxu0 0.0
  %625 = vmatprep.subr.mxu0 0.0
  %626 = vmatpush2.msra.mxu0 0.0
  %627 = vmatprep.subr.mxu0 0.0
  %628 = vmatpush2.msra.mxu0 0.0
  %629 = vmatprep.subr.mxu0 0.0
  %630 = vmatpush2.msra.mxu0 0.0
  %631 = vmatprep.subr.mxu0 0.0
  %632 = vmatpush2.msra.mxu0 0.0
  %633 = vmatprep.subr.mxu0 0.0
  %634 = vmatpush2.msra.mxu0 0.0
  %635 = vmatprep.subr.mxu0 0.0
  %636 = vmatpush2.msra.mxu0 0.0
  %637 = vmatprep.subr.mxu0 0.0
  %638 = vmatpush2.msra.mxu0 0.0
  %639 = vmatprep.subr.mxu0 0.0
  %640 = vmatpush2.msra.mxu0 0.0
  %641 = vmatprep.subr.mxu0 0.0
  %642 = vmatpush2.msra.mxu0 0.0
  %643 = vmatprep.subr.mxu0 0.0
  %644 = vmatpush2.msra.mxu0 0.0
  %645 = vmatprep.mubr.f32.mxu0 0.0
  %646 = vmatmul.mubr.f32.gmra.mxu0 %v575
  %v647 = vpop.f32.mrf.mxu0
  %v648 = vadd.f32 0.0, %v647
  %v649 = vpop.f32.mrf.mxu0
  %v650 = vadd.f32 0.0, %v649
  %651 = vdwg.mxu0
  %652 = vmatprep.subr.mxu0 0.0
  %653 = vmatpush1.msra.mxu0 %v67
  %654 = vmatprep.subr.mxu0 0.0
  %655 = vmatpush1.msra.mxu0 %v64
  %656 = vmatprep.subr.mxu0 0.0
  %657 = vmatpush1.msra.mxu0 %v61
  %658 = vmatprep.subr.mxu0 0.0
  %659 = vmatpush1.msra.mxu0 %v58
  %660 = vmatprep.subr.mxu0 0.0
  %661 = vmatpush1.msra.mxu0 %v55
  %662 = vmatprep.subr.mxu0 0.0
  %663 = vmatpush1.msra.mxu0 %v52
  %664 = vmatprep.subr.mxu0 0.0
  %665 = vmatpush1.msra.mxu0 %v49
  %666 = vmatprep.subr.mxu0 0.0
  %667 = vmatpush1.msra.mxu0 %v46
  %668 = vmatprep.subr.mxu0 0.0
  %669 = vmatpush1.msra.mxu0 %v43
  %670 = vmatprep.subr.mxu0 0.0
  %671 = vmatpush1.msra.mxu0 %v40
  %672 = vmatprep.subr.mxu0 0.0
  %673 = vmatpush1.msra.mxu0 %v37
  %674 = vmatprep.subr.mxu0 0.0
  %675 = vmatpush1.msra.mxu0 %v34
  %676 = vmatprep.subr.mxu0 0.0
  %677 = vmatpush1.msra.mxu0 %v31
  %678 = vmatprep.subr.mxu0 0.0
  %679 = vmatpush1.msra.mxu0 %v28
  %680 = vmatprep.subr.mxu0 0.0
  %681 = vmatpush1.msra.mxu0 %v25
  %682 = vmatprep.subr.mxu0 0.0
  %683 = vmatpush1.msra.mxu0 %v22
  %684 = vmatprep.subr.mxu0 0.0
  %685 = vmatpush2.msra.mxu0 0.0
  %686 = vmatprep.subr.mxu0 0.0
  %687 = vmatpush2.msra.mxu0 0.0
  %688 = vmatprep.subr.mxu0 0.0
  %689 = vmatpush2.msra.mxu0 0.0
  %690 = vmatprep.subr.mxu0 0.0
  %691 = vmatpush2.msra.mxu0 0.0
  %692 = vmatprep.subr.mxu0 0.0
  %693 = vmatpush2.msra.mxu0 0.0
  %694 = vmatprep.subr.mxu0 0.0
  %695 = vmatpush2.msra.mxu0 0.0
  %696 = vmatprep.subr.mxu0 0.0
  %697 = vmatpush2.msra.mxu0 0.0
  %698 = vmatprep.subr.mxu0 0.0
  %699 = vmatpush2.msra.mxu0 0.0
  %700 = vmatprep.subr.mxu0 0.0
  %701 = vmatpush2.msra.mxu0 0.0
  %702 = vmatprep.subr.mxu0 0.0
  %703 = vmatpush2.msra.mxu0 0.0
  %704 = vmatprep.subr.mxu0 0.0
  %705 = vmatpush2.msra.mxu0 0.0
  %706 = vmatprep.subr.mxu0 0.0
  %707 = vmatpush2.msra.mxu0 0.0
  %708 = vmatprep.subr.mxu0 0.0
  %709 = vmatpush2.msra.mxu0 0.0
  %710 = vmatprep.subr.mxu0 0.0
  %711 = vmatpush2.msra.mxu0 0.0
  %712 = vmatprep.subr.mxu0 0.0
  %713 = vmatpush2.msra.mxu0 0.0
  %714 = vmatprep.subr.mxu0 0.0
  %715 = vmatpush2.msra.mxu0 0.0
  %716 = vmatprep.mubr.f32.mxu0 0.0
  %717 = vmatmul.mubr.f32.gmra.mxu0 %v575
  %v718 = vpop.f32.mrf.mxu0
  %v719 = vadd.f32 0.0, %v718
  %v720 = vpop.f32.mrf.mxu0
  %721 = vdwg.mxu0
  %v722 = vadd.f32 %v578, %v648
  %v723 = vxor.u32 %v722, 2147483648
  %v724 = vmul.f32 %v723, 1.442695
  %v725 = vpow.pop %v724
  %v726 = vadd.f32 %v725, 1.0
  %v727 = vrcp.pop %v726
  %v728 = vmul.f32 1.0, %v727
  %v729 = vadd.f32 %v579, %v650
  %v730 = vxor.u32 %v729, 2147483648
  %v731 = vmul.f32 %v730, 1.442695
  %v732 = vpow.pop %v731
  %v733 = vadd.f32 %v732, 1.0
  %v734 = vrcp.pop %v733
  %v735 = vmul.f32 1.0, %v734
  %v736 = vadd.f32 %v719, %v73
  %v737 = vmul.f32 %v728, %v736
  %v738 = vadd.f32 %v580, %v737
  %v739 = vtanh.pop %v738
  %v740 = vsub.f32 %v575, %v739
  %v741 = vmul.f32 %v735, %v740
  %v742 = vadd.f32 %v739, %v741
  %v743 = vmax.f32 %v576, %v742
  %s744 = scalar_lea.vmem %s0, 96
  %v745 = vld [vmem:[%s744] sm:$0xff]
  %v746 = vld [vmem:[%s744 + $0x8] sm:$0xff]
  %v747 = vld [vmem:[%s744 + $0x10] sm:$0xff]
  %748 = vmatprep.subr.mxu0 %v66
  %749 = vmatpush1.msra.mxu0 %v65
  %750 = vmatprep.subr.mxu0 %v63
  %751 = vmatpush1.msra.mxu0 %v62
  %752 = vmatprep.subr.mxu0 %v60
  %753 = vmatpush1.msra.mxu0 %v59
  %754 = vmatprep.subr.mxu0 %v57
  %755 = vmatpush1.msra.mxu0 %v56
  %756 = vmatprep.subr.mxu0 %v54
  %757 = vmatpush1.msra.mxu0 %v53
  %758 = vmatprep.subr.mxu0 %v51
  %759 = vmatpush1.msra.mxu0 %v50
  %760 = vmatprep.subr.mxu0 %v48
  %761 = vmatpush1.msra.mxu0 %v47
  %762 = vmatprep.subr.mxu0 %v45
  %763 = vmatpush1.msra.mxu0 %v44
  %764 = vmatprep.subr.mxu0 %v42
  %765 = vmatpush1.msra.mxu0 %v41
  %766 = vmatprep.subr.mxu0 %v39
  %767 = vmatpush1.msra.mxu0 %v38
  %768 = vmatprep.subr.mxu0 %v36
  %769 = vmatpush1.msra.mxu0 %v35
  %770 = vmatprep.subr.mxu0 %v33
  %771 = vmatpush1.msra.mxu0 %v32
  %772 = vmatprep.subr.mxu0 %v30
  %773 = vmatpush1.msra.mxu0 %v29
  %774 = vmatprep.subr.mxu0 %v27
  %775 = vmatpush1.msra.mxu0 %v26
  %776 = vmatprep.subr.mxu0 %v24
  %777 = vmatpush1.msra.mxu0 %v23
  %778 = vmatprep.subr.mxu0 %v21
  %779 = vmatpush1.msra.mxu0 %v20
  %780 = vmatprep.subr.mxu0 0.0
  %781 = vmatpush2.msra.mxu0 0.0
  %782 = vmatprep.subr.mxu0 0.0
  %783 = vmatpush2.msra.mxu0 0.0
  %784 = vmatprep.subr.mxu0 0.0
  %785 = vmatpush2.msra.mxu0 0.0
  %786 = vmatprep.subr.mxu0 0.0
  %787 = vmatpush2.msra.mxu0 0.0
  %788 = vmatprep.subr.mxu0 0.0
  %789 = vmatpush2.msra.mxu0 0.0
  %790 = vmatprep.subr.mxu0 0.0
  %791 = vmatpush2.msra.mxu0 0.0
  %792 = vmatprep.subr.mxu0 0.0
  %793 = vmatpush2.msra.mxu0 0.0
  %794 = vmatprep.subr.mxu0 0.0
  %795 = vmatpush2.msra.mxu0 0.0
  %796 = vmatprep.subr.mxu0 0.0
  %797 = vmatpush2.msra.mxu0 0.0
  %798 = vmatprep.subr.mxu0 0.0
  %799 = vmatpush2.msra.mxu0 0.0
  %800 = vmatprep.subr.mxu0 0.0
  %801 = vmatpush2.msra.mxu0 0.0
  %802 = vmatprep.subr.mxu0 0.0
  %803 = vmatpush2.msra.mxu0 0.0
  %804 = vmatprep.subr.mxu0 0.0
  %805 = vmatpush2.msra.mxu0 0.0
  %806 = vmatprep.subr.mxu0 0.0
  %807 = vmatpush2.msra.mxu0 0.0
  %808 = vmatprep.subr.mxu0 0.0
  %809 = vmatpush2.msra.mxu0 0.0
  %810 = vmatprep.subr.mxu0 0.0
  %811 = vmatpush2.msra.mxu0 0.0
  %812 = vmatprep.mubr.f32.mxu0 0.0
  %813 = vmatmul.mubr.f32.gmra.mxu0 %v742
  %v814 = vpop.f32.mrf.mxu0
  %v815 = vadd.f32 0.0, %v814
  %v816 = vpop.f32.mrf.mxu0
  %v817 = vadd.f32 0.0, %v816
  %818 = vdwg.mxu0
  %819 = vmatprep.subr.mxu0 0.0
  %820 = vmatpush1.msra.mxu0 %v67
  %821 = vmatprep.subr.mxu0 0.0
  %822 = vmatpush1.msra.mxu0 %v64
  %823 = vmatprep.subr.mxu0 0.0
  %824 = vmatpush1.msra.mxu0 %v61
  %825 = vmatprep.subr.mxu0 0.0
  %826 = vmatpush1.msra.mxu0 %v58
  %827 = vmatprep.subr.mxu0 0.0
  %828 = vmatpush1.msra.mxu0 %v55
  %829 = vmatprep.subr.mxu0 0.0
  %830 = vmatpush1.msra.mxu0 %v52
  %831 = vmatprep.subr.mxu0 0.0
  %832 = vmatpush1.msra.mxu0 %v49
  %833 = vmatprep.subr.mxu0 0.0
  %834 = vmatpush1.msra.mxu0 %v46
  %835 = vmatprep.subr.mxu0 0.0
  %836 = vmatpush1.msra.mxu0 %v43
  %837 = vmatprep.subr.mxu0 0.0
  %838 = vmatpush1.msra.mxu0 %v40
  %839 = vmatprep.subr.mxu0 0.0
  %840 = vmatpush1.msra.mxu0 %v37
  %841 = vmatprep.subr.mxu0 0.0
  %842 = vmatpush1.msra.mxu0 %v34
  %843 = vmatprep.subr.mxu0 0.0
  %844 = vmatpush1.msra.mxu0 %v31
  %845 = vmatprep.subr.mxu0 0.0
  %846 = vmatpush1.msra.mxu0 %v28
  %847 = vmatprep.subr.mxu0 0.0
  %848 = vmatpush1.msra.mxu0 %v25
  %849 = vmatprep.subr.mxu0 0.0
  %850 = vmatpush1.msra.mxu0 %v22
  %851 = vmatprep.subr.mxu0 0.0
  %852 = vmatpush2.msra.mxu0 0.0
  %853 = vmatprep.subr.mxu0 0.0
  %854 = vmatpush2.msra.mxu0 0.0
  %855 = vmatprep.subr.mxu0 0.0
  %856 = vmatpush2.msra.mxu0 0.0
  %857 = vmatprep.subr.mxu0 0.0
  %858 = vmatpush2.msra.mxu0 0.0
  %859 = vmatprep.subr.mxu0 0.0
  %860 = vmatpush2.msra.mxu0 0.0
  %861 = vmatprep.subr.mxu0 0.0
  %862 = vmatpush2.msra.mxu0 0.0
  %863 = vmatprep.subr.mxu0 0.0
  %864 = vmatpush2.msra.mxu0 0.0
  %865 = vmatprep.subr.mxu0 0.0
  %866 = vmatpush2.msra.mxu0 0.0
  %867 = vmatprep.subr.mxu0 0.0
  %868 = vmatpush2.msra.mxu0 0.0
  %869 = vmatprep.subr.mxu0 0.0
  %870 = vmatpush2.msra.mxu0 0.0
  %871 = vmatprep.subr.mxu0 0.0
  %872 = vmatpush2.msra.mxu0 0.0
  %873 = vmatprep.subr.mxu0 0.0
  %874 = vmatpush2.msra.mxu0 0.0
  %875 = vmatprep.subr.mxu0 0.0
  %876 = vmatpush2.msra.mxu0 0.0
  %877 = vmatprep.subr.mxu0 0.0
  %878 = vmatpush2.msra.mxu0 0.0
  %879 = vmatprep.subr.mxu0 0.0
  %880 = vmatpush2.msra.mxu0 0.0
  %881 = vmatprep.subr.mxu0 0.0
  %882 = vmatpush2.msra.mxu0 0.0
  %883 = vmatprep.mubr.f32.mxu0 0.0
  %884 = vmatmul.mubr.f32.gmra.mxu0 %v742
  %v885 = vpop.f32.mrf.mxu0
  %v886 = vadd.f32 0.0, %v885
  %v887 = vpop.f32.mrf.mxu0
  %888 = vdwg.mxu0
  %v889 = vadd.f32 %v745, %v815
  %v890 = vxor.u32 %v889, 2147483648
  %v891 = vmul.f32 %v890, 1.442695
  %v892 = vpow.pop %v891
  %v893 = vadd.f32 %v892, 1.0
  %v894 = vrcp.pop %v893
  %v895 = vmul.f32 1.0, %v894
  %v896 = vadd.f32 %v746, %v817
  %v897 = vxor.u32 %v896, 2147483648
  %v898 = vmul.f32 %v897, 1.442695
  %v899 = vpow.pop %v898
  %v900 = vadd.f32 %v899, 1.0
  %v901 = vrcp.pop %v900
  %v902 = vmul.f32 1.0, %v901
  %v903 = vadd.f32 %v886, %v73
  %v904 = vmul.f32 %v895, %v903
  %v905 = vadd.f32 %v747, %v904
  %v906 = vtanh.pop %v905
  %v907 = vsub.f32 %v742, %v906
  %v908 = vmul.f32 %v902, %v907
  %v909 = vadd.f32 %v906, %v908
  %v910 = vmax.f32 %v743, %v909
  %s911 = scalar_lea.vmem %s0, 120
  %v912 = vld [vmem:[%s911] sm:$0xff]
  %v913 = vld [vmem:[%s911 + $0x8] sm:$0xff]
  %v914 = vld [vmem:[%s911 + $0x10] sm:$0xff]
  %915 = vmatprep.subr.mxu0 %v66
  %916 = vmatpush1.msra.mxu0 %v65
  %917 = vmatprep.subr.mxu0 %v63
  %918 = vmatpush1.msra.mxu0 %v62
  %919 = vmatprep.subr.mxu0 %v60
  %920 = vmatpush1.msra.mxu0 %v59
  %921 = vmatprep.subr.mxu0 %v57
  %922 = vmatpush1.msra.mxu0 %v56
  %923 = vmatprep.subr.mxu0 %v54
  %924 = vmatpush1.msra.mxu0 %v53
  %925 = vmatprep.subr.mxu0 %v51
  %926 = vmatpush1.msra.mxu0 %v50
  %927 = vmatprep.subr.mxu0 %v48
  %928 = vmatpush1.msra.mxu0 %v47
  %929 = vmatprep.subr.mxu0 %v45
  %930 = vmatpush1.msra.mxu0 %v44
  %931 = vmatprep.subr.mxu0 %v42
  %932 = vmatpush1.msra.mxu0 %v41
  %933 = vmatprep.subr.mxu0 %v39
  %934 = vmatpush1.msra.mxu0 %v38
  %935 = vmatprep.subr.mxu0 %v36
  %936 = vmatpush1.msra.mxu0 %v35
  %937 = vmatprep.subr.mxu0 %v33
  %938 = vmatpush1.msra.mxu0 %v32
  %939 = vmatprep.subr.mxu0 %v30
  %940 = vmatpush1.msra.mxu0 %v29
  %941 = vmatprep.subr.mxu0 %v27
  %942 = vmatpush1.msra.mxu0 %v26
  %943 = vmatprep.subr.mxu0 %v24
  %944 = vmatpush1.msra.mxu0 %v23
  %945 = vmatprep.subr.mxu0 %v21
  %946 = vmatpush1.msra.mxu0 %v20
  %947 = vmatprep.subr.mxu0 0.0
  %948 = vmatpush2.msra.mxu0 0.0
  %949 = vmatprep.subr.mxu0 0.0
  %950 = vmatpush2.msra.mxu0 0.0
  %951 = vmatprep.subr.mxu0 0.0
  %952 = vmatpush2.msra.mxu0 0.0
  %953 = vmatprep.subr.mxu0 0.0
  %954 = vmatpush2.msra.mxu0 0.0
  %955 = vmatprep.subr.mxu0 0.0
  %956 = vmatpush2.msra.mxu0 0.0
  %957 = vmatprep.subr.mxu0 0.0
  %958 = vmatpush2.msra.mxu0 0.0
  %959 = vmatprep.subr.mxu0 0.0
  %960 = vmatpush2.msra.mxu0 0.0
  %961 = vmatprep.subr.mxu0 0.0
  %962 = vmatpush2.msra.mxu0 0.0
  %963 = vmatprep.subr.mxu0 0.0
  %964 = vmatpush2.msra.mxu0 0.0
  %965 = vmatprep.subr.mxu0 0.0
  %966 = vmatpush2.msra.mxu0 0.0
  %967 = vmatprep.subr.mxu0 0.0
  %968 = vmatpush2.msra.mxu0 0.0
  %969 = vmatprep.subr.mxu0 0.0
  %970 = vmatpush2.msra.mxu0 0.0
  %971 = vmatprep.subr.mxu0 0.0
  %972 = vmatpush2.msra.mxu0 0.0
  %973 = vmatprep.subr.mxu0 0.0
  %974 = vmatpush2.msra.mxu0 0.0
  %975 = vmatprep.subr.mxu0 0.0
  %976 = vmatpush2.msra.mxu0 0.0
  %977 = vmatprep.subr.mxu0 0.0
  %978 = vmatpush2.msra.mxu0 0.0
  %979 = vmatprep.mubr.f32.mxu0 0.0
  %980 = vmatmul.mubr.f32.gmra.mxu0 %v909
  %v981 = vpop.f32.mrf.mxu0
  %v982 = vadd.f32 0.0, %v981
  %v983 = vpop.f32.mrf.mxu0
  %v984 = vadd.f32 0.0, %v983
  %985 = vdwg.mxu0
  %986 = vmatprep.subr.mxu0 0.0
  %987 = vmatpush1.msra.mxu0 %v67
  %988 = vmatprep.subr.mxu0 0.0
  %989 = vmatpush1.msra.mxu0 %v64
  %990 = vmatprep.subr.mxu0 0.0
  %991 = vmatpush1.msra.mxu0 %v61
  %992 = vmatprep.subr.mxu0 0.0
  %993 = vmatpush1.msra.mxu0 %v58
  %994 = vmatprep.subr.mxu0 0.0
  %995 = vmatpush1.msra.mxu0 %v55
  %996 = vmatprep.subr.mxu0 0.0
  %997 = vmatpush1.msra.mxu0 %v52
  %998 = vmatprep.subr.mxu0 0.0
  %999 = vmatpush1.msra.mxu0 %v49
  %1000 = vmatprep.subr.mxu0 0.0
  %1001 = vmatpush1.msra.mxu0 %v46
  %1002 = vmatprep.subr.mxu0 0.0
  %1003 = vmatpush1.msra.mxu0 %v43
  %1004 = vmatprep.subr.mxu0 0.0
  %1005 = vmatpush1.msra.mxu0 %v40
  %1006 = vmatprep.subr.mxu0 0.0
  %1007 = vmatpush1.msra.mxu0 %v37
  %1008 = vmatprep.subr.mxu0 0.0
  %1009 = vmatpush1.msra.mxu0 %v34
  %1010 = vmatprep.subr.mxu0 0.0
  %1011 = vmatpush1.msra.mxu0 %v31
  %1012 = vmatprep.subr.mxu0 0.0
  %1013 = vmatpush1.msra.mxu0 %v28
  %1014 = vmatprep.subr.mxu0 0.0
  %1015 = vmatpush1.msra.mxu0 %v25
  %1016 = vmatprep.subr.mxu0 0.0
  %1017 = vmatpush1.msra.mxu0 %v22
  %1018 = vmatprep.subr.mxu0 0.0
  %1019 = vmatpush2.msra.mxu0 0.0
  %1020 = vmatprep.subr.mxu0 0.0
  %1021 = vmatpush2.msra.mxu0 0.0
  %1022 = vmatprep.subr.mxu0 0.0
  %1023 = vmatpush2.msra.mxu0 0.0
  %1024 = vmatprep.subr.mxu0 0.0
  %1025 = vmatpush2.msra.mxu0 0.0
  %1026 = vmatprep.subr.mxu0 0.0
  %1027 = vmatpush2.msra.mxu0 0.0
  %1028 = vmatprep.subr.mxu0 0.0
  %1029 = vmatpush2.msra.mxu0 0.0
  %1030 = vmatprep.subr.mxu0 0.0
  %1031 = vmatpush2.msra.mxu0 0.0
  %1032 = vmatprep.subr.mxu0 0.0
  %1033 = vmatpush2.msra.mxu0 0.0
  %1034 = vmatprep.subr.mxu0 0.0
  %1035 = vmatpush2.msra.mxu0 0.0
  %1036 = vmatprep.subr.mxu0 0.0
  %1037 = vmatpush2.msra.mxu0 0.0
  %1038 = vmatprep.subr.mxu0 0.0
  %1039 = vmatpush2.msra.mxu0 0.0
  %1040 = vmatprep.subr.mxu0 0.0
  %1041 = vmatpush2.msra.mxu0 0.0
  %1042 = vmatprep.subr.mxu0 0.0
  %1043 = vmatpush2.msra.mxu0 0.0
  %1044 = vmatprep.subr.mxu0 0.0
  %1045 = vmatpush2.msra.mxu0 0.0
  %1046 = vmatprep.subr.mxu0 0.0
  %1047 = vmatpush2.msra.mxu0 0.0
  %1048 = vmatprep.subr.mxu0 0.0
  %1049 = vmatpush2.msra.mxu0 0.0
  %1050 = vmatprep.mubr.f32.mxu0 0.0
  %1051 = vmatmul.mubr.f32.gmra.mxu0 %v909
  %v1052 = vpop.f32.mrf.mxu0
  %v1053 = vadd.f32 0.0, %v1052
  %v1054 = vpop.f32.mrf.mxu0
  %1055 = vdwg.mxu0
  %v1056 = vadd.f32 %v912, %v982
  %v1057 = vxor.u32 %v1056, 2147483648
  %v1058 = vmul.f32 %v1057, 1.442695
  %v1059 = vpow.pop %v1058
  %v1060 = vadd.f32 %v1059, 1.0
  %v1061 = vrcp.pop %v1060
  %v1062 = vmul.f32 1.0, %v1061
  %v1063 = vadd.f32 %v913, %v984
  %v1064 = vxor.u32 %v1063, 2147483648
  %v1065 = vmul.f32 %v1064, 1.442695
  %v1066 = vpow.pop %v1065
  %v1067 = vadd.f32 %v1066, 1.0
  %v1068 = vrcp.pop %v1067
  %v1069 = vmul.f32 1.0, %v1068
  %v1070 = vadd.f32 %v1053, %v73
  %v1071 = vmul.f32 %v1062, %v1070
  %v1072 = vadd.f32 %v914, %v1071
  %v1073 = vtanh.pop %v1072
  %v1074 = vsub.f32 %v909, %v1073
  %v1075 = vmul.f32 %v1069, %v1074
  %v1076 = vadd.f32 %v1073, %v1075
  %v1077 = vmax.f32 %v910, %v1076
  %s1078 = scalar_lea.vmem %s0, 144
  %v1079 = vld [vmem:[%s1078] sm:$0xff]
  %v1080 = vld [vmem:[%s1078 + $0x8] sm:$0xff]
  %v1081 = vld [vmem:[%s1078 + $0x10] sm:$0xff]
  %1082 = vmatprep.subr.mxu0 %v66
  %1083 = vmatpush1.msra.mxu0 %v65
  %1084 = vmatprep.subr.mxu0 %v63
  %1085 = vmatpush1.msra.mxu0 %v62
  %1086 = vmatprep.subr.mxu0 %v60
  %1087 = vmatpush1.msra.mxu0 %v59
  %1088 = vmatprep.subr.mxu0 %v57
  %1089 = vmatpush1.msra.mxu0 %v56
  %1090 = vmatprep.subr.mxu0 %v54
  %1091 = vmatpush1.msra.mxu0 %v53
  %1092 = vmatprep.subr.mxu0 %v51
  %1093 = vmatpush1.msra.mxu0 %v50
  %1094 = vmatprep.subr.mxu0 %v48
  %1095 = vmatpush1.msra.mxu0 %v47
  %1096 = vmatprep.subr.mxu0 %v45
  %1097 = vmatpush1.msra.mxu0 %v44
  %1098 = vmatprep.subr.mxu0 %v42
  %1099 = vmatpush1.msra.mxu0 %v41
  %1100 = vmatprep.subr.mxu0 %v39
  %1101 = vmatpush1.msra.mxu0 %v38
  %1102 = vmatprep.subr.mxu0 %v36
  %1103 = vmatpush1.msra.mxu0 %v35
  %1104 = vmatprep.subr.mxu0 %v33
  %1105 = vmatpush1.msra.mxu0 %v32
  %1106 = vmatprep.subr.mxu0 %v30
  %1107 = vmatpush1.msra.mxu0 %v29
  %1108 = vmatprep.subr.mxu0 %v27
  %1109 = vmatpush1.msra.mxu0 %v26
  %1110 = vmatprep.subr.mxu0 %v24
  %1111 = vmatpush1.msra.mxu0 %v23
  %1112 = vmatprep.subr.mxu0 %v21
  %1113 = vmatpush1.msra.mxu0 %v20
  %1114 = vmatprep.subr.mxu0 0.0
  %1115 = vmatpush2.msra.mxu0 0.0
  %1116 = vmatprep.subr.mxu0 0.0
  %1117 = vmatpush2.msra.mxu0 0.0
  %1118 = vmatprep.subr.mxu0 0.0
  %1119 = vmatpush2.msra.mxu0 0.0
  %1120 = vmatprep.subr.mxu0 0.0
  %1121 = vmatpush2.msra.mxu0 0.0
  %1122 = vmatprep.subr.mxu0 0.0
  %1123 = vmatpush2.msra.mxu0 0.0
  %1124 = vmatprep.subr.mxu0 0.0
  %1125 = vmatpush2.msra.mxu0 0.0
  %1126 = vmatprep.subr.mxu0 0.0
  %1127 = vmatpush2.msra.mxu0 0.0
  %1128 = vmatprep.subr.mxu0 0.0
  %1129 = vmatpush2.msra.mxu0 0.0
  %1130 = vmatprep.subr.mxu0 0.0
  %1131 = vmatpush2.msra.mxu0 0.0
  %1132 = vmatprep.subr.mxu0 0.0
  %1133 = vmatpush2.msra.mxu0 0.0
  %1134 = vmatprep.subr.mxu0 0.0
  %1135 = vmatpush2.msra.mxu0 0.0
  %1136 = vmatprep.subr.mxu0 0.0
  %1137 = vmatpush2.msra.mxu0 0.0
  %1138 = vmatprep.subr.mxu0 0.0
  %1139 = vmatpush2.msra.mxu0 0.0
  %1140 = vmatprep.subr.mxu0 0.0
  %1141 = vmatpush2.msra.mxu0 0.0
  %1142 = vmatprep.subr.mxu0 0.0
  %1143 = vmatpush2.msra.mxu0 0.0
  %1144 = vmatprep.subr.mxu0 0.0
  %1145 = vmatpush2.msra.mxu0 0.0
  %1146 = vmatprep.mubr.f32.mxu0 0.0
  %1147 = vmatmul.mubr.f32.gmra.mxu0 %v1076
  %v1148 = vpop.f32.mrf.mxu0
  %v1149 = vadd.f32 0.0, %v1148
  %v1150 = vpop.f32.mrf.mxu0
  %v1151 = vadd.f32 0.0, %v1150
  %1152 = vdwg.mxu0
  %1153 = vmatprep.subr.mxu0 0.0
  %1154 = vmatpush1.msra.mxu0 %v67
  %1155 = vmatprep.subr.mxu0 0.0
  %1156 = vmatpush1.msra.mxu0 %v64
  %1157 = vmatprep.subr.mxu0 0.0
  %1158 = vmatpush1.msra.mxu0 %v61
  %1159 = vmatprep.subr.mxu0 0.0
  %1160 = vmatpush1.msra.mxu0 %v58
  %1161 = vmatprep.subr.mxu0 0.0
  %1162 = vmatpush1.msra.mxu0 %v55
  %1163 = vmatprep.subr.mxu0 0.0
  %1164 = vmatpush1.msra.mxu0 %v52
  %1165 = vmatprep.subr.mxu0 0.0
  %1166 = vmatpush1.msra.mxu0 %v49
  %1167 = vmatprep.subr.mxu0 0.0
  %1168 = vmatpush1.msra.mxu0 %v46
  %1169 = vmatprep.subr.mxu0 0.0
  %1170 = vmatpush1.msra.mxu0 %v43
  %1171 = vmatprep.subr.mxu0 0.0
  %1172 = vmatpush1.msra.mxu0 %v40
  %1173 = vmatprep.subr.mxu0 0.0
  %1174 = vmatpush1.msra.mxu0 %v37
  %1175 = vmatprep.subr.mxu0 0.0
  %1176 = vmatpush1.msra.mxu0 %v34
  %1177 = vmatprep.subr.mxu0 0.0
  %1178 = vmatpush1.msra.mxu0 %v31
  %1179 = vmatprep.subr.mxu0 0.0
  %1180 = vmatpush1.msra.mxu0 %v28
  %1181 = vmatprep.subr.mxu0 0.0
  %1182 = vmatpush1.msra.mxu0 %v25
  %1183 = vmatprep.subr.mxu0 0.0
  %1184 = vmatpush1.msra.mxu0 %v22
  %1185 = vmatprep.subr.mxu0 0.0
  %1186 = vmatpush2.msra.mxu0 0.0
  %1187 = vmatprep.subr.mxu0 0.0
  %1188 = vmatpush2.msra.mxu0 0.0
  %1189 = vmatprep.subr.mxu0 0.0
  %1190 = vmatpush2.msra.mxu0 0.0
  %1191 = vmatprep.subr.mxu0 0.0
  %1192 = vmatpush2.msra.mxu0 0.0
  %1193 = vmatprep.subr.mxu0 0.0
  %1194 = vmatpush2.msra.mxu0 0.0
  %1195 = vmatprep.subr.mxu0 0.0
  %1196 = vmatpush2.msra.mxu0 0.0
  %1197 = vmatprep.subr.mxu0 0.0
  %1198 = vmatpush2.msra.mxu0 0.0
  %1199 = vmatprep.subr.mxu0 0.0
  %1200 = vmatpush2.msra.mxu0 0.0
  %1201 = vmatprep.subr.mxu0 0.0
  %1202 = vmatpush2.msra.mxu0 0.0
  %1203 = vmatprep.subr.mxu0 0.0
  %1204 = vmatpush2.msra.mxu0 0.0
  %1205 = vmatprep.subr.mxu0 0.0
  %1206 = vmatpush2.msra.mxu0 0.0
  %1207 = vmatprep.subr.mxu0 0.0
  %1208 = vmatpush2.msra.mxu0 0.0
  %1209 = vmatprep.subr.mxu0 0.0
  %1210 = vmatpush2.msra.mxu0 0.0
  %1211 = vmatprep.subr.mxu0 0.0
  %1212 = vmatpush2.msra.mxu0 0.0
  %1213 = vmatprep.subr.mxu0 0.0
  %1214 = vmatpush2.msra.mxu0 0.0
  %1215 = vmatprep.subr.mxu0 0.0
  %1216 = vmatpush2.msra.mxu0 0.0
  %1217 = vmatprep.mubr.f32.mxu0 0.0
  %1218 = vmatmul.mubr.f32.gmra.mxu0 %v1076
  %v1219 = vpop.f32.mrf.mxu0
  %v1220 = vadd.f32 0.0, %v1219
  %v1221 = vpop.f32.mrf.mxu0
  %1222 = vdwg.mxu0
  %v1223 = vadd.f32 %v1079, %v1149
  %v1224 = vxor.u32 %v1223, 2147483648
  %v1225 = vmul.f32 %v1224, 1.442695
  %v1226 = vpow.pop %v1225
  %v1227 = vadd.f32 %v1226, 1.0
  %v1228 = vrcp.pop %v1227
  %v1229 = vmul.f32 1.0, %v1228
  %v1230 = vadd.f32 %v1080, %v1151
  %v1231 = vxor.u32 %v1230, 2147483648
  %v1232 = vmul.f32 %v1231, 1.442695
  %v1233 = vpow.pop %v1232
  %v1234 = vadd.f32 %v1233, 1.0
  %v1235 = vrcp.pop %v1234
  %v1236 = vmul.f32 1.0, %v1235
  %v1237 = vadd.f32 %v1220, %v73
  %v1238 = vmul.f32 %v1229, %v1237
  %v1239 = vadd.f32 %v1081, %v1238
  %v1240 = vtanh.pop %v1239
  %v1241 = vsub.f32 %v1076, %v1240
  %v1242 = vmul.f32 %v1236, %v1241
  %v1243 = vadd.f32 %v1240, %v1242
  %v1244 = vmax.f32 %v1077, %v1243
  %s1245 = scalar_lea.vmem %s0, 168
  %v1246 = vld [vmem:[%s1245] sm:$0xff]
  %v1247 = vld [vmem:[%s1245 + $0x8] sm:$0xff]
  %v1248 = vld [vmem:[%s1245 + $0x10] sm:$0xff]
  %1249 = vmatprep.subr.mxu0 %v66
  %1250 = vmatpush1.msra.mxu0 %v65
  %1251 = vmatprep.subr.mxu0 %v63
  %1252 = vmatpush1.msra.mxu0 %v62
  %1253 = vmatprep.subr.mxu0 %v60
  %1254 = vmatpush1.msra.mxu0 %v59
  %1255 = vmatprep.subr.mxu0 %v57
  %1256 = vmatpush1.msra.mxu0 %v56
  %1257 = vmatprep.subr.mxu0 %v54
  %1258 = vmatpush1.msra.mxu0 %v53
  %1259 = vmatprep.subr.mxu0 %v51
  %1260 = vmatpush1.msra.mxu0 %v50
  %1261 = vmatprep.subr.mxu0 %v48
  %1262 = vmatpush1.msra.mxu0 %v47
  %1263 = vmatprep.subr.mxu0 %v45
  %1264 = vmatpush1.msra.mxu0 %v44
  %1265 = vmatprep.subr.mxu0 %v42
  %1266 = vmatpush1.msra.mxu0 %v41
  %1267 = vmatprep.subr.mxu0 %v39
  %1268 = vmatpush1.msra.mxu0 %v38
  %1269 = vmatprep.subr.mxu0 %v36
  %1270 = vmatpush1.msra.mxu0 %v35
  %1271 = vmatprep.subr.mxu0 %v33
  %1272 = vmatpush1.msra.mxu0 %v32
  %1273 = vmatprep.subr.mxu0 %v30
  %1274 = vmatpush1.msra.mxu0 %v29
  %1275 = vmatprep.subr.mxu0 %v27
  %1276 = vmatpush1.msra.mxu0 %v26
  %1277 = vmatprep.subr.mxu0 %v24
  %1278 = vmatpush1.msra.mxu0 %v23
  %1279 = vmatprep.subr.mxu0 %v21
  %1280 = vmatpush1.msra.mxu0 %v20
  %1281 = vmatprep.subr.mxu0 0.0
  %1282 = vmatpush2.msra.mxu0 0.0
  %1283 = vmatprep.subr.mxu0 0.0
  %1284 = vmatpush2.msra.mxu0 0.0
  %1285 = vmatprep.subr.mxu0 0.0
  %1286 = vmatpush2.msra.mxu0 0.0
  %1287 = vmatprep.subr.mxu0 0.0
  %1288 = vmatpush2.msra.mxu0 0.0
  %1289 = vmatprep.subr.mxu0 0.0
  %1290 = vmatpush2.msra.mxu0 0.0
  %1291 = vmatprep.subr.mxu0 0.0
  %1292 = vmatpush2.msra.mxu0 0.0
  %1293 = vmatprep.subr.mxu0 0.0
  %1294 = vmatpush2.msra.mxu0 0.0
  %1295 = vmatprep.subr.mxu0 0.0
  %1296 = vmatpush2.msra.mxu0 0.0
  %1297 = vmatprep.subr.mxu0 0.0
  %1298 = vmatpush2.msra.mxu0 0.0
  %1299 = vmatprep.subr.mxu0 0.0
  %1300 = vmatpush2.msra.mxu0 0.0
  %1301 = vmatprep.subr.mxu0 0.0
  %1302 = vmatpush2.msra.mxu0 0.0
  %1303 = vmatprep.subr.mxu0 0.0
  %1304 = vmatpush2.msra.mxu0 0.0
  %1305 = vmatprep.subr.mxu0 0.0
  %1306 = vmatpush2.msra.mxu0 0.0
  %1307 = vmatprep.subr.mxu0 0.0
  %1308 = vmatpush2.msra.mxu0 0.0
  %1309 = vmatprep.subr.mxu0 0.0
  %1310 = vmatpush2.msra.mxu0 0.0
  %1311 = vmatprep.subr.mxu0 0.0
  %1312 = vmatpush2.msra.mxu0 0.0
  %1313 = vmatprep.mubr.f32.mxu0 0.0
  %1314 = vmatmul.mubr.f32.gmra.mxu0 %v1243
  %v1315 = vpop.f32.mrf.mxu0
  %v1316 = vadd.f32 0.0, %v1315
  %v1317 = vpop.f32.mrf.mxu0
  %v1318 = vadd.f32 0.0, %v1317
  %1319 = vdwg.mxu0
  %1320 = vmatprep.subr.mxu0 0.0
  %1321 = vmatpush1.msra.mxu0 %v67
  %1322 = vmatprep.subr.mxu0 0.0
  %1323 = vmatpush1.msra.mxu0 %v64
  %1324 = vmatprep.subr.mxu0 0.0
  %1325 = vmatpush1.msra.mxu0 %v61
  %1326 = vmatprep.subr.mxu0 0.0
  %1327 = vmatpush1.msra.mxu0 %v58
  %1328 = vmatprep.subr.mxu0 0.0
  %1329 = vmatpush1.msra.mxu0 %v55
  %1330 = vmatprep.subr.mxu0 0.0
  %1331 = vmatpush1.msra.mxu0 %v52
  %1332 = vmatprep.subr.mxu0 0.0
  %1333 = vmatpush1.msra.mxu0 %v49
  %1334 = vmatprep.subr.mxu0 0.0
  %1335 = vmatpush1.msra.mxu0 %v46
  %1336 = vmatprep.subr.mxu0 0.0
  %1337 = vmatpush1.msra.mxu0 %v43
  %1338 = vmatprep.subr.mxu0 0.0
  %1339 = vmatpush1.msra.mxu0 %v40
  %1340 = vmatprep.subr.mxu0 0.0
  %1341 = vmatpush1.msra.mxu0 %v37
  %1342 = vmatprep.subr.mxu0 0.0
  %1343 = vmatpush1.msra.mxu0 %v34
  %1344 = vmatprep.subr.mxu0 0.0
  %1345 = vmatpush1.msra.mxu0 %v31
  %1346 = vmatprep.subr.mxu0 0.0
  %1347 = vmatpush1.msra.mxu0 %v28
  %1348 = vmatprep.subr.mxu0 0.0
  %1349 = vmatpush1.msra.mxu0 %v25
  %1350 = vmatprep.subr.mxu0 0.0
  %1351 = vmatpush1.msra.mxu0 %v22
  %1352 = vmatprep.subr.mxu0 0.0
  %1353 = vmatpush2.msra.mxu0 0.0
  %1354 = vmatprep.subr.mxu0 0.0
  %1355 = vmatpush2.msra.mxu0 0.0
  %1356 = vmatprep.subr.mxu0 0.0
  %1357 = vmatpush2.msra.mxu0 0.0
  %1358 = vmatprep.subr.mxu0 0.0
  %1359 = vmatpush2.msra.mxu0 0.0
  %1360 = vmatprep.subr.mxu0 0.0
  %1361 = vmatpush2.msra.mxu0 0.0
  %1362 = vmatprep.subr.mxu0 0.0
  %1363 = vmatpush2.msra.mxu0 0.0
  %1364 = vmatprep.subr.mxu0 0.0
  %1365 = vmatpush2.msra.mxu0 0.0
  %1366 = vmatprep.subr.mxu0 0.0
  %1367 = vmatpush2.msra.mxu0 0.0
  %1368 = vmatprep.subr.mxu0 0.0
  %1369 = vmatpush2.msra.mxu0 0.0
  %1370 = vmatprep.subr.mxu0 0.0
  %1371 = vmatpush2.msra.mxu0 0.0
  %1372 = vmatprep.subr.mxu0 0.0
  %1373 = vmatpush2.msra.mxu0 0.0
  %1374 = vmatprep.subr.mxu0 0.0
  %1375 = vmatpush2.msra.mxu0 0.0
  %1376 = vmatprep.subr.mxu0 0.0
  %1377 = vmatpush2.msra.mxu0 0.0
  %1378 = vmatprep.subr.mxu0 0.0
  %1379 = vmatpush2.msra.mxu0 0.0
  %1380 = vmatprep.subr.mxu0 0.0
  %1381 = vmatpush2.msra.mxu0 0.0
  %1382 = vmatprep.subr.mxu0 0.0
  %1383 = vmatpush2.msra.mxu0 0.0
  %1384 = vmatprep.mubr.f32.mxu0 0.0
  %1385 = vmatmul.mubr.f32.gmra.mxu0 %v1243
  %v1386 = vpop.f32.mrf.mxu0
  %v1387 = vadd.f32 0.0, %v1386
  %v1388 = vpop.f32.mrf.mxu0
  %1389 = vdwg.mxu0
  %v1390 = vadd.f32 %v1246, %v1316
  %v1391 = vxor.u32 %v1390, 2147483648
  %v1392 = vmul.f32 %v1391, 1.442695
  %v1393 = vpow.pop %v1392
  %v1394 = vadd.f32 %v1393, 1.0
  %v1395 = vrcp.pop %v1394
  %v1396 = vmul.f32 1.0, %v1395
  %v1397 = vadd.f32 %v1247, %v1318
  %v1398 = vxor.u32 %v1397, 2147483648
  %v1399 = vmul.f32 %v1398, 1.442695
  %v1400 = vpow.pop %v1399
  %v1401 = vadd.f32 %v1400, 1.0
  %v1402 = vrcp.pop %v1401
  %v1403 = vmul.f32 1.0, %v1402
  %v1404 = vadd.f32 %v1387, %v73
  %v1405 = vmul.f32 %v1396, %v1404
  %v1406 = vadd.f32 %v1248, %v1405
  %v1407 = vtanh.pop %v1406
  %v1408 = vsub.f32 %v1243, %v1407
  %v1409 = vmul.f32 %v1403, %v1408
  %v1410 = vadd.f32 %v1407, %v1409
  %v1411 = vmax.f32 %v1244, %v1410
  %1412 = vst [vmem:[#allocation2] sm:$0xff] %v1410
  %1413 = vst [vmem:[%s3] sm:$0xff] %v1411
  // Predicated region
  $region18: #{my_gru_forward.1} parent=0 // pred_check
    _
  $region19: #{my_gru_forward.1} parent=0 // pred_check_branch
    %1415 = sbr.rel (0) target = $region21
  $region20: #{my_gru_forward.1} parent=0 // pred_region
    _
  $region21: #{my_gru_forward.1} parent=0 // pred_fallthru
    _
  // Predicated region
  $region22: #{my_gru_forward.1} parent=0 // pred_check
    _
  $region23: #{my_gru_forward.1} parent=0 // pred_check_branch
    %1417 = sbr.rel (0) target = $region25
  $region24: #{my_gru_forward.1} parent=0 // pred_region
    _
  $region25: #{my_gru_forward.1} parent=0 // pred_fallthru
    _

</llo_original>
